<compile_context>
chip_gen: v6e
topology: v6e:2x2x1
jax: 0.10.0
libtpu: 0.0.40
codegen_flags: <defaults>
</compile_context>

<pallas_src>
import jax
import jax.numpy as jnp
from jax import lax
from jax.experimental import pallas as pl
from jax.experimental.pallas import tpu as pltpu


def _round_up(x, m):
    return ((x + m - 1) // m) * m


def lstm_entity_kernel(x_ref, wih_ref, whh_ref, b_ref, wout_ref, bout_ref,
                       out_ref):
    """Full LSTM recurrence + output projection in one invocation.

    x_ref   : (seq*Bp, emb)   f32  time-major input, batch padded to Bp (sublane mult.)
    wih_ref : (emb, 4*Hp)     f32  weight_ih_l0.T, gate-major padded to Hp lanes/gate
    whh_ref : (Hp, 4*Hp)      f32  weight_hh_l0.T, padded (extra rows/cols zero)
    b_ref   : (1, 4*Hp)       f32  bias_ih + bias_hh, padded
    wout_ref: (Hp, Tp)        f32  hidden2tag.weight.T, padded
    bout_ref: (1, Tp)         f32  hidden2tag.bias, padded
    out_ref : (Bp, Tp)        f32  logits (padded; wrapper slices real rows/cols)
    """
    Bp = out_ref.shape[0]
    Hp = whh_ref.shape[0]
    seq_len = x_ref.shape[0] // Bp

    # --- Hoisted input projection: one MXU call for all timesteps ------------
    xw = (jnp.dot(x_ref[...], wih_ref[...],
                  preferred_element_type=jnp.float32)
          + b_ref[...])                                  # (seq*Bp, 4*Hp)

    whh = whh_ref[...]                                   # (Hp, 4*Hp), loaded once

    # --- Recurrence: h/c stay in vregs, loop fully unrolled ------------------
    h = jnp.zeros((Bp, Hp), jnp.float32)
    c = jnp.zeros((Bp, Hp), jnp.float32)

    for t in range(seq_len):                             # static -> fully unrolled
        # sublane-aligned static slice (rows t*Bp : (t+1)*Bp, Bp multiple of 8)
        gates = (xw[t * Bp:(t + 1) * Bp, :]
                 + jnp.dot(h, whh, preferred_element_type=jnp.float32))
        # lane-aligned gate slices (each block is Hp=128 lanes wide); torch
        # gate order [i, f, g, o]
        i_g = jax.nn.sigmoid(gates[:, 0 * Hp:1 * Hp])
        f_g = jax.nn.sigmoid(gates[:, 1 * Hp:2 * Hp])
        g_g = jnp.tanh(gates[:, 2 * Hp:3 * Hp])
        o_g = jax.nn.sigmoid(gates[:, 3 * Hp:4 * Hp])
        c = f_g * c + i_g * g_g
        h = o_g * jnp.tanh(c)

    # --- hidden2tag(h_n.squeeze()) -------------------------------------------
    out_ref[...] = (jnp.dot(h, wout_ref[...],
                            preferred_element_type=jnp.float32)
                    + bout_ref[...])


def init_params(key, vocab_size, embedding_dim, hidden_dim, tagset_size):
    ks = jax.random.split(key, 7)
    scale = 0.1
    params = dict(
        emb_table=scale * jax.random.normal(ks[0], (vocab_size, embedding_dim),
                                            jnp.float32),
        w_ih=scale * jax.random.normal(ks[1], (4 * hidden_dim, embedding_dim),
                                       jnp.float32),   # torch weight_ih_l0
        w_hh=scale * jax.random.normal(ks[2], (4 * hidden_dim, hidden_dim),
                                       jnp.float32),   # torch weight_hh_l0
        b_ih=scale * jax.random.normal(ks[3], (4 * hidden_dim,), jnp.float32),
        b_hh=scale * jax.random.normal(ks[4], (4 * hidden_dim,), jnp.float32),
        w_out=scale * jax.random.normal(ks[5], (tagset_size, hidden_dim),
                                        jnp.float32),  # torch hidden2tag.weight
        b_out=scale * jax.random.normal(ks[6], (tagset_size,), jnp.float32),
    )
    return params


def lstm_entity_forward(sentence, params):
    """sentence: (batch, seq) int32 token ids -> (batch, tagset) logits."""
    emb_table = params["emb_table"]
    # Embedding lookup (plain JAX gather, outside the kernel)
    embeds = jnp.take(emb_table, sentence, axis=0)              # (batch, seq, emb)
    x = jnp.transpose(embeds, (1, 0, 2)).astype(jnp.float32)    # (seq, batch, emb)

    seq_len, batch, emb = x.shape
    H = params["w_hh"].shape[1]
    tagset = params["w_out"].shape[0]

    Bp = _round_up(batch, 8)       # sublane multiple
    Hp = _round_up(H, 128)         # lane multiple per gate block
    Tp = _round_up(tagset, 128)    # lane-dense output

    wih_t = params["w_ih"].T                                    # (emb, 4H)
    whh_t = params["w_hh"].T                                    # (H, 4H)
    bias = (params["b_ih"] + params["b_hh"]).reshape(1, 4 * H)  # (1, 4H)
    wout_t = params["w_out"].T                                  # (H, tagset)
    bout = params["b_out"].reshape(1, -1)                       # (1, tagset)

    # Gate-major lane padding: each of the 4 gate blocks widened H -> Hp with
    # zeros so every gate slice in the kernel starts on a 128-lane boundary.
    def pad_gate_cols(w):                                       # (rows, 4H) -> (rows, 4Hp)
        rows = w.shape[0]
        w4 = w.reshape(rows, 4, H)
        w4p = jnp.pad(w4, ((0, 0), (0, 0), (0, Hp - H)))
        return w4p.reshape(rows, 4 * Hp)

    wih_p = pad_gate_cols(wih_t)                                          # (emb, 4Hp)
    whh_p = jnp.pad(pad_gate_cols(whh_t), ((0, Hp - H), (0, 0)))          # (Hp, 4Hp)
    bias_p = pad_gate_cols(bias)                                          # (1, 4Hp)
    wout_p = jnp.pad(wout_t, ((0, Hp - H), (0, Tp - tagset)))             # (Hp, Tp)
    bout_p = jnp.pad(bout, ((0, 0), (0, Tp - tagset)))                    # (1, Tp)

    # Pad batch to Bp and flatten time into sublanes: (seq, Bp, emb) -> (seq*Bp, emb)
    x_p = jnp.pad(x, ((0, 0), (0, Bp - batch), (0, 0)))
    x2d = x_p.reshape(seq_len * Bp, emb)

    out = pl.pallas_call(
        lstm_entity_kernel,
        out_shape=jax.ShapeDtypeStruct((Bp, Tp), jnp.float32),
        in_specs=[pl.BlockSpec(memory_space=pltpu.MemorySpace.VMEM)] * 6,
        out_specs=pl.BlockSpec(memory_space=pltpu.MemorySpace.VMEM),
    )(x2d, wih_p, whh_p, bias_p, wout_p, bout_p)

    return out[:batch, :tagset]


def reference_forward(sentence, params):
    """Pure-JAX reference mirroring torch.nn.LSTM semantics (gate order ifgo)."""
    embeds = jnp.take(params["emb_table"], sentence, axis=0)
    x = jnp.transpose(embeds, (1, 0, 2)).astype(jnp.float32)    # (seq, batch, emb)
    batch = x.shape[1]
    H = params["w_hh"].shape[1]
    wih_t, whh_t = params["w_ih"].T, params["w_hh"].T
    bias = params["b_ih"] + params["b_hh"]

    def step(carry, x_t):
        h, c = carry
        gates = x_t @ wih_t + h @ whh_t + bias
        i = jax.nn.sigmoid(gates[:, 0 * H:1 * H])
        f = jax.nn.sigmoid(gates[:, 1 * H:2 * H])
        g = jnp.tanh(gates[:, 2 * H:3 * H])
        o = jax.nn.sigmoid(gates[:, 3 * H:4 * H])
        c_new = f * c + i * g
        h_new = o * jnp.tanh(c_new)
        return (h_new, c_new), None

    h0 = jnp.zeros((batch, H), jnp.float32)
    c0 = jnp.zeros((batch, H), jnp.float32)
    (h_n, _), _ = lax.scan(step, (h0, c0), x)
    return h_n @ params["w_out"].T + params["b_out"]


if __name__ == "__main__":
    # Small shapes consistent with the module's forward pass.
    vocab_size = 100
    embedding_dim = 16
    hidden_dim = 32
    tagset_size = 5
    batch = 2
    seq_len = 8

    key = jax.random.PRNGKey(0)
    pkey, skey = jax.random.split(key)
    params = init_params(pkey, vocab_size, embedding_dim, hidden_dim,
                         tagset_size)
    sentence = jax.random.randint(skey, (batch, seq_len), 0, vocab_size,
                                  dtype=jnp.int32)

    out = lstm_entity_forward(sentence, params)
    out = jax.block_until_ready(out)

    ref = jax.block_until_ready(reference_forward(sentence, params))
    assert out.shape == (batch, tagset_size)
    assert jnp.allclose(out, ref, atol=1e-4, rtol=1e-4), (out, ref)

    print("KERNEL_OK")
</pallas_src>

<mosaic_0001>
module attributes {stable_mosaic.version = 11 : i64} {
  func.func @lstm_entity_kernel(%arg0: memref<64x16xf32, #tpu.memory_space<vmem>>, %arg1: memref<16x512xf32, #tpu.memory_space<vmem>>, %arg2: memref<128x512xf32, #tpu.memory_space<vmem>>, %arg3: memref<1x512xf32, #tpu.memory_space<vmem>>, %arg4: memref<128x128xf32, #tpu.memory_space<vmem>>, %arg5: memref<1x128xf32, #tpu.memory_space<vmem>>, %arg6: memref<8x128xf32, #tpu.memory_space<vmem>>) attributes {dimension_semantics = [], scalar_prefetch = 0 : i64, scratch_operands = 0 : i64, tpu.core_type = #tpu.core_type<tc>} {
    %c0 = arith.constant 0 : index
    %c0_0 = arith.constant 0 : index
    %0 = vector.load %arg0[%c0, %c0_0] : memref<64x16xf32, #tpu.memory_space<vmem>>, vector<64x16xf32>
    %c0_1 = arith.constant 0 : index
    %c0_2 = arith.constant 0 : index
    %1 = vector.load %arg1[%c0_1, %c0_2] : memref<16x512xf32, #tpu.memory_space<vmem>>, vector<16x512xf32>
    %cst = arith.constant dense<0.000000e+00> : vector<64x512xf32>
    %2 = tpu.matmul %0, %1, %cst {dimension_numbers = #tpu.dot_dimension_numbers<[1], [0], [0], [1], [0, 0, 1, 1], [], []>} : vector<64x16xf32>, vector<16x512xf32>, vector<64x512xf32> -> vector<64x512xf32>
    %c0_3 = arith.constant 0 : index
    %c0_4 = arith.constant 0 : index
    %3 = vector.load %arg3[%c0_3, %c0_4] : memref<1x512xf32, #tpu.memory_space<vmem>>, vector<1x512xf32>
    %4 = vector.broadcast %3 : vector<1x512xf32> to vector<64x512xf32>
    %5 = arith.addf %2, %4 : vector<64x512xf32>
    %c0_5 = arith.constant 0 : index
    %c0_6 = arith.constant 0 : index
    %6 = vector.load %arg2[%c0_5, %c0_6] : memref<128x512xf32, #tpu.memory_space<vmem>>, vector<128x512xf32>
    %cst_7 = arith.constant 0.000000e+00 : f32
    %7 = vector.broadcast %cst_7 : f32 to vector<8x128xf32>
    %cst_8 = arith.constant 0.000000e+00 : f32
    %8 = vector.broadcast %cst_8 : f32 to vector<8x128xf32>
    %9 = vector.extract_strided_slice %5 {offsets = [0, 0], sizes = [8, 512], strides = [1, 1]} : vector<64x512xf32> to vector<8x512xf32>
    %cst_9 = arith.constant dense<0.000000e+00> : vector<8x512xf32>
    %10 = tpu.matmul %7, %6, %cst_9 {dimension_numbers = #tpu.dot_dimension_numbers<[1], [0], [0], [1], [0, 0, 1, 1], [], []>} : vector<8x128xf32>, vector<128x512xf32>, vector<8x512xf32> -> vector<8x512xf32>
    %11 = arith.addf %9, %10 : vector<8x512xf32>
    %12 = vector.extract_strided_slice %11 {offsets = [0, 0], sizes = [8, 128], strides = [1, 1]} : vector<8x512xf32> to vector<8x128xf32>
    %13 = arith.negf %12 : vector<8x128xf32>
    %14 = math.exp %13 : vector<8x128xf32>
    %cst_10 = arith.constant 1.000000e+00 : f32
    %15 = vector.broadcast %cst_10 : f32 to vector<8x128xf32>
    %16 = arith.addf %15, %14 : vector<8x128xf32>
    %17 = arith.divf %15, %16 : vector<8x128xf32>
    %18 = vector.extract_strided_slice %11 {offsets = [0, 128], sizes = [8, 128], strides = [1, 1]} : vector<8x512xf32> to vector<8x128xf32>
    %19 = arith.negf %18 : vector<8x128xf32>
    %20 = math.exp %19 : vector<8x128xf32>
    %cst_11 = arith.constant 1.000000e+00 : f32
    %21 = vector.broadcast %cst_11 : f32 to vector<8x128xf32>
    %22 = arith.addf %21, %20 : vector<8x128xf32>
    %23 = arith.divf %21, %22 : vector<8x128xf32>
    %24 = vector.extract_strided_slice %11 {offsets = [0, 256], sizes = [8, 128], strides = [1, 1]} : vector<8x512xf32> to vector<8x128xf32>
    %25 = math.tanh %24 : vector<8x128xf32>
    %26 = vector.extract_strided_slice %11 {offsets = [0, 384], sizes = [8, 128], strides = [1, 1]} : vector<8x512xf32> to vector<8x128xf32>
    %27 = arith.negf %26 : vector<8x128xf32>
    %28 = math.exp %27 : vector<8x128xf32>
    %cst_12 = arith.constant 1.000000e+00 : f32
    %29 = vector.broadcast %cst_12 : f32 to vector<8x128xf32>
    %30 = arith.addf %29, %28 : vector<8x128xf32>
    %31 = arith.divf %29, %30 : vector<8x128xf32>
    %32 = arith.mulf %23, %8 : vector<8x128xf32>
    %33 = arith.mulf %17, %25 : vector<8x128xf32>
    %34 = arith.addf %32, %33 : vector<8x128xf32>
    %35 = math.tanh %34 : vector<8x128xf32>
    %36 = arith.mulf %31, %35 : vector<8x128xf32>
    %37 = vector.extract_strided_slice %5 {offsets = [8, 0], sizes = [8, 512], strides = [1, 1]} : vector<64x512xf32> to vector<8x512xf32>
    %cst_13 = arith.constant dense<0.000000e+00> : vector<8x512xf32>
    %38 = tpu.matmul %36, %6, %cst_13 {dimension_numbers = #tpu.dot_dimension_numbers<[1], [0], [0], [1], [0, 0, 1, 1], [], []>} : vector<8x128xf32>, vector<128x512xf32>, vector<8x512xf32> -> vector<8x512xf32>
    %39 = arith.addf %37, %38 : vector<8x512xf32>
    %40 = vector.extract_strided_slice %39 {offsets = [0, 0], sizes = [8, 128], strides = [1, 1]} : vector<8x512xf32> to vector<8x128xf32>
    %41 = arith.negf %40 : vector<8x128xf32>
    %42 = math.exp %41 : vector<8x128xf32>
    %cst_14 = arith.constant 1.000000e+00 : f32
    %43 = vector.broadcast %cst_14 : f32 to vector<8x128xf32>
    %44 = arith.addf %43, %42 : vector<8x128xf32>
    %45 = arith.divf %43, %44 : vector<8x128xf32>
    %46 = vector.extract_strided_slice %39 {offsets = [0, 128], sizes = [8, 128], strides = [1, 1]} : vector<8x512xf32> to vector<8x128xf32>
    %47 = arith.negf %46 : vector<8x128xf32>
    %48 = math.exp %47 : vector<8x128xf32>
    %cst_15 = arith.constant 1.000000e+00 : f32
    %49 = vector.broadcast %cst_15 : f32 to vector<8x128xf32>
    %50 = arith.addf %49, %48 : vector<8x128xf32>
    %51 = arith.divf %49, %50 : vector<8x128xf32>
    %52 = vector.extract_strided_slice %39 {offsets = [0, 256], sizes = [8, 128], strides = [1, 1]} : vector<8x512xf32> to vector<8x128xf32>
    %53 = math.tanh %52 : vector<8x128xf32>
    %54 = vector.extract_strided_slice %39 {offsets = [0, 384], sizes = [8, 128], strides = [1, 1]} : vector<8x512xf32> to vector<8x128xf32>
    %55 = arith.negf %54 : vector<8x128xf32>
    %56 = math.exp %55 : vector<8x128xf32>
    %cst_16 = arith.constant 1.000000e+00 : f32
    %57 = vector.broadcast %cst_16 : f32 to vector<8x128xf32>
    %58 = arith.addf %57, %56 : vector<8x128xf32>
    %59 = arith.divf %57, %58 : vector<8x128xf32>
    %60 = arith.mulf %51, %34 : vector<8x128xf32>
    %61 = arith.mulf %45, %53 : vector<8x128xf32>
    %62 = arith.addf %60, %61 : vector<8x128xf32>
    %63 = math.tanh %62 : vector<8x128xf32>
    %64 = arith.mulf %59, %63 : vector<8x128xf32>
    %65 = vector.extract_strided_slice %5 {offsets = [16, 0], sizes = [8, 512], strides = [1, 1]} : vector<64x512xf32> to vector<8x512xf32>
    %cst_17 = arith.constant dense<0.000000e+00> : vector<8x512xf32>
    %66 = tpu.matmul %64, %6, %cst_17 {dimension_numbers = #tpu.dot_dimension_numbers<[1], [0], [0], [1], [0, 0, 1, 1], [], []>} : vector<8x128xf32>, vector<128x512xf32>, vector<8x512xf32> -> vector<8x512xf32>
    %67 = arith.addf %65, %66 : vector<8x512xf32>
    %68 = vector.extract_strided_slice %67 {offsets = [0, 0], sizes = [8, 128], strides = [1, 1]} : vector<8x512xf32> to vector<8x128xf32>
    %69 = arith.negf %68 : vector<8x128xf32>
    %70 = math.exp %69 : vector<8x128xf32>
    %cst_18 = arith.constant 1.000000e+00 : f32
    %71 = vector.broadcast %cst_18 : f32 to vector<8x128xf32>
    %72 = arith.addf %71, %70 : vector<8x128xf32>
    %73 = arith.divf %71, %72 : vector<8x128xf32>
    %74 = vector.extract_strided_slice %67 {offsets = [0, 128], sizes = [8, 128], strides = [1, 1]} : vector<8x512xf32> to vector<8x128xf32>
    %75 = arith.negf %74 : vector<8x128xf32>
    %76 = math.exp %75 : vector<8x128xf32>
    %cst_19 = arith.constant 1.000000e+00 : f32
    %77 = vector.broadcast %cst_19 : f32 to vector<8x128xf32>
    %78 = arith.addf %77, %76 : vector<8x128xf32>
    %79 = arith.divf %77, %78 : vector<8x128xf32>
    %80 = vector.extract_strided_slice %67 {offsets = [0, 256], sizes = [8, 128], strides = [1, 1]} : vector<8x512xf32> to vector<8x128xf32>
    %81 = math.tanh %80 : vector<8x128xf32>
    %82 = vector.extract_strided_slice %67 {offsets = [0, 384], sizes = [8, 128], strides = [1, 1]} : vector<8x512xf32> to vector<8x128xf32>
    %83 = arith.negf %82 : vector<8x128xf32>
    %84 = math.exp %83 : vector<8x128xf32>
    %cst_20 = arith.constant 1.000000e+00 : f32
    %85 = vector.broadcast %cst_20 : f32 to vector<8x128xf32>
    %86 = arith.addf %85, %84 : vector<8x128xf32>
    %87 = arith.divf %85, %86 : vector<8x128xf32>
    %88 = arith.mulf %79, %62 : vector<8x128xf32>
    %89 = arith.mulf %73, %81 : vector<8x128xf32>
    %90 = arith.addf %88, %89 : vector<8x128xf32>
    %91 = math.tanh %90 : vector<8x128xf32>
    %92 = arith.mulf %87, %91 : vector<8x128xf32>
    %93 = vector.extract_strided_slice %5 {offsets = [24, 0], sizes = [8, 512], strides = [1, 1]} : vector<64x512xf32> to vector<8x512xf32>
    %cst_21 = arith.constant dense<0.000000e+00> : vector<8x512xf32>
    %94 = tpu.matmul %92, %6, %cst_21 {dimension_numbers = #tpu.dot_dimension_numbers<[1], [0], [0], [1], [0, 0, 1, 1], [], []>} : vector<8x128xf32>, vector<128x512xf32>, vector<8x512xf32> -> vector<8x512xf32>
    %95 = arith.addf %93, %94 : vector<8x512xf32>
    %96 = vector.extract_strided_slice %95 {offsets = [0, 0], sizes = [8, 128], strides = [1, 1]} : vector<8x512xf32> to vector<8x128xf32>
    %97 = arith.negf %96 : vector<8x128xf32>
    %98 = math.exp %97 : vector<8x128xf32>
    %cst_22 = arith.constant 1.000000e+00 : f32
    %99 = vector.broadcast %cst_22 : f32 to vector<8x128xf32>
    %100 = arith.addf %99, %98 : vector<8x128xf32>
    %101 = arith.divf %99, %100 : vector<8x128xf32>
    %102 = vector.extract_strided_slice %95 {offsets = [0, 128], sizes = [8, 128], strides = [1, 1]} : vector<8x512xf32> to vector<8x128xf32>
    %103 = arith.negf %102 : vector<8x128xf32>
    %104 = math.exp %103 : vector<8x128xf32>
    %cst_23 = arith.constant 1.000000e+00 : f32
    %105 = vector.broadcast %cst_23 : f32 to vector<8x128xf32>
    %106 = arith.addf %105, %104 : vector<8x128xf32>
    %107 = arith.divf %105, %106 : vector<8x128xf32>
    %108 = vector.extract_strided_slice %95 {offsets = [0, 256], sizes = [8, 128], strides = [1, 1]} : vector<8x512xf32> to vector<8x128xf32>
    %109 = math.tanh %108 : vector<8x128xf32>
    %110 = vector.extract_strided_slice %95 {offsets = [0, 384], sizes = [8, 128], strides = [1, 1]} : vector<8x512xf32> to vector<8x128xf32>
    %111 = arith.negf %110 : vector<8x128xf32>
    %112 = math.exp %111 : vector<8x128xf32>
    %cst_24 = arith.constant 1.000000e+00 : f32
    %113 = vector.broadcast %cst_24 : f32 to vector<8x128xf32>
    %114 = arith.addf %113, %112 : vector<8x128xf32>
    %115 = arith.divf %113, %114 : vector<8x128xf32>
    %116 = arith.mulf %107, %90 : vector<8x128xf32>
    %117 = arith.mulf %101, %109 : vector<8x128xf32>
    %118 = arith.addf %116, %117 : vector<8x128xf32>
    %119 = math.tanh %118 : vector<8x128xf32>
    %120 = arith.mulf %115, %119 : vector<8x128xf32>
    %121 = vector.extract_strided_slice %5 {offsets = [32, 0], sizes = [8, 512], strides = [1, 1]} : vector<64x512xf32> to vector<8x512xf32>
    %cst_25 = arith.constant dense<0.000000e+00> : vector<8x512xf32>
    %122 = tpu.matmul %120, %6, %cst_25 {dimension_numbers = #tpu.dot_dimension_numbers<[1], [0], [0], [1], [0, 0, 1, 1], [], []>} : vector<8x128xf32>, vector<128x512xf32>, vector<8x512xf32> -> vector<8x512xf32>
    %123 = arith.addf %121, %122 : vector<8x512xf32>
    %124 = vector.extract_strided_slice %123 {offsets = [0, 0], sizes = [8, 128], strides = [1, 1]} : vector<8x512xf32> to vector<8x128xf32>
    %125 = arith.negf %124 : vector<8x128xf32>
    %126 = math.exp %125 : vector<8x128xf32>
    %cst_26 = arith.constant 1.000000e+00 : f32
    %127 = vector.broadcast %cst_26 : f32 to vector<8x128xf32>
    %128 = arith.addf %127, %126 : vector<8x128xf32>
    %129 = arith.divf %127, %128 : vector<8x128xf32>
    %130 = vector.extract_strided_slice %123 {offsets = [0, 128], sizes = [8, 128], strides = [1, 1]} : vector<8x512xf32> to vector<8x128xf32>
    %131 = arith.negf %130 : vector<8x128xf32>
    %132 = math.exp %131 : vector<8x128xf32>
    %cst_27 = arith.constant 1.000000e+00 : f32
    %133 = vector.broadcast %cst_27 : f32 to vector<8x128xf32>
    %134 = arith.addf %133, %132 : vector<8x128xf32>
    %135 = arith.divf %133, %134 : vector<8x128xf32>
    %136 = vector.extract_strided_slice %123 {offsets = [0, 256], sizes = [8, 128], strides = [1, 1]} : vector<8x512xf32> to vector<8x128xf32>
    %137 = math.tanh %136 : vector<8x128xf32>
    %138 = vector.extract_strided_slice %123 {offsets = [0, 384], sizes = [8, 128], strides = [1, 1]} : vector<8x512xf32> to vector<8x128xf32>
    %139 = arith.negf %138 : vector<8x128xf32>
    %140 = math.exp %139 : vector<8x128xf32>
    %cst_28 = arith.constant 1.000000e+00 : f32
    %141 = vector.broadcast %cst_28 : f32 to vector<8x128xf32>
    %142 = arith.addf %141, %140 : vector<8x128xf32>
    %143 = arith.divf %141, %142 : vector<8x128xf32>
    %144 = arith.mulf %135, %118 : vector<8x128xf32>
    %145 = arith.mulf %129, %137 : vector<8x128xf32>
    %146 = arith.addf %144, %145 : vector<8x128xf32>
    %147 = math.tanh %146 : vector<8x128xf32>
    %148 = arith.mulf %143, %147 : vector<8x128xf32>
    %149 = vector.extract_strided_slice %5 {offsets = [40, 0], sizes = [8, 512], strides = [1, 1]} : vector<64x512xf32> to vector<8x512xf32>
    %cst_29 = arith.constant dense<0.000000e+00> : vector<8x512xf32>
    %150 = tpu.matmul %148, %6, %cst_29 {dimension_numbers = #tpu.dot_dimension_numbers<[1], [0], [0], [1], [0, 0, 1, 1], [], []>} : vector<8x128xf32>, vector<128x512xf32>, vector<8x512xf32> -> vector<8x512xf32>
    %151 = arith.addf %149, %150 : vector<8x512xf32>
    %152 = vector.extract_strided_slice %151 {offsets = [0, 0], sizes = [8, 128], strides = [1, 1]} : vector<8x512xf32> to vector<8x128xf32>
    %153 = arith.negf %152 : vector<8x128xf32>
    %154 = math.exp %153 : vector<8x128xf32>
    %cst_30 = arith.constant 1.000000e+00 : f32
    %155 = vector.broadcast %cst_30 : f32 to vector<8x128xf32>
    %156 = arith.addf %155, %154 : vector<8x128xf32>
    %157 = arith.divf %155, %156 : vector<8x128xf32>
    %158 = vector.extract_strided_slice %151 {offsets = [0, 128], sizes = [8, 128], strides = [1, 1]} : vector<8x512xf32> to vector<8x128xf32>
    %159 = arith.negf %158 : vector<8x128xf32>
    %160 = math.exp %159 : vector<8x128xf32>
    %cst_31 = arith.constant 1.000000e+00 : f32
    %161 = vector.broadcast %cst_31 : f32 to vector<8x128xf32>
    %162 = arith.addf %161, %160 : vector<8x128xf32>
    %163 = arith.divf %161, %162 : vector<8x128xf32>
    %164 = vector.extract_strided_slice %151 {offsets = [0, 256], sizes = [8, 128], strides = [1, 1]} : vector<8x512xf32> to vector<8x128xf32>
    %165 = math.tanh %164 : vector<8x128xf32>
    %166 = vector.extract_strided_slice %151 {offsets = [0, 384], sizes = [8, 128], strides = [1, 1]} : vector<8x512xf32> to vector<8x128xf32>
    %167 = arith.negf %166 : vector<8x128xf32>
    %168 = math.exp %167 : vector<8x128xf32>
    %cst_32 = arith.constant 1.000000e+00 : f32
    %169 = vector.broadcast %cst_32 : f32 to vector<8x128xf32>
    %170 = arith.addf %169, %168 : vector<8x128xf32>
    %171 = arith.divf %169, %170 : vector<8x128xf32>
    %172 = arith.mulf %163, %146 : vector<8x128xf32>
    %173 = arith.mulf %157, %165 : vector<8x128xf32>
    %174 = arith.addf %172, %173 : vector<8x128xf32>
    %175 = math.tanh %174 : vector<8x128xf32>
    %176 = arith.mulf %171, %175 : vector<8x128xf32>
    %177 = vector.extract_strided_slice %5 {offsets = [48, 0], sizes = [8, 512], strides = [1, 1]} : vector<64x512xf32> to vector<8x512xf32>
    %cst_33 = arith.constant dense<0.000000e+00> : vector<8x512xf32>
    %178 = tpu.matmul %176, %6, %cst_33 {dimension_numbers = #tpu.dot_dimension_numbers<[1], [0], [0], [1], [0, 0, 1, 1], [], []>} : vector<8x128xf32>, vector<128x512xf32>, vector<8x512xf32> -> vector<8x512xf32>
    %179 = arith.addf %177, %178 : vector<8x512xf32>
    %180 = vector.extract_strided_slice %179 {offsets = [0, 0], sizes = [8, 128], strides = [1, 1]} : vector<8x512xf32> to vector<8x128xf32>
    %181 = arith.negf %180 : vector<8x128xf32>
    %182 = math.exp %181 : vector<8x128xf32>
    %cst_34 = arith.constant 1.000000e+00 : f32
    %183 = vector.broadcast %cst_34 : f32 to vector<8x128xf32>
    %184 = arith.addf %183, %182 : vector<8x128xf32>
    %185 = arith.divf %183, %184 : vector<8x128xf32>
    %186 = vector.extract_strided_slice %179 {offsets = [0, 128], sizes = [8, 128], strides = [1, 1]} : vector<8x512xf32> to vector<8x128xf32>
    %187 = arith.negf %186 : vector<8x128xf32>
    %188 = math.exp %187 : vector<8x128xf32>
    %cst_35 = arith.constant 1.000000e+00 : f32
    %189 = vector.broadcast %cst_35 : f32 to vector<8x128xf32>
    %190 = arith.addf %189, %188 : vector<8x128xf32>
    %191 = arith.divf %189, %190 : vector<8x128xf32>
    %192 = vector.extract_strided_slice %179 {offsets = [0, 256], sizes = [8, 128], strides = [1, 1]} : vector<8x512xf32> to vector<8x128xf32>
    %193 = math.tanh %192 : vector<8x128xf32>
    %194 = vector.extract_strided_slice %179 {offsets = [0, 384], sizes = [8, 128], strides = [1, 1]} : vector<8x512xf32> to vector<8x128xf32>
    %195 = arith.negf %194 : vector<8x128xf32>
    %196 = math.exp %195 : vector<8x128xf32>
    %cst_36 = arith.constant 1.000000e+00 : f32
    %197 = vector.broadcast %cst_36 : f32 to vector<8x128xf32>
    %198 = arith.addf %197, %196 : vector<8x128xf32>
    %199 = arith.divf %197, %198 : vector<8x128xf32>
    %200 = arith.mulf %191, %174 : vector<8x128xf32>
    %201 = arith.mulf %185, %193 : vector<8x128xf32>
    %202 = arith.addf %200, %201 : vector<8x128xf32>
    %203 = math.tanh %202 : vector<8x128xf32>
    %204 = arith.mulf %199, %203 : vector<8x128xf32>
    %205 = vector.extract_strided_slice %5 {offsets = [56, 0], sizes = [8, 512], strides = [1, 1]} : vector<64x512xf32> to vector<8x512xf32>
    %cst_37 = arith.constant dense<0.000000e+00> : vector<8x512xf32>
    %206 = tpu.matmul %204, %6, %cst_37 {dimension_numbers = #tpu.dot_dimension_numbers<[1], [0], [0], [1], [0, 0, 1, 1], [], []>} : vector<8x128xf32>, vector<128x512xf32>, vector<8x512xf32> -> vector<8x512xf32>
    %207 = arith.addf %205, %206 : vector<8x512xf32>
    %208 = vector.extract_strided_slice %207 {offsets = [0, 0], sizes = [8, 128], strides = [1, 1]} : vector<8x512xf32> to vector<8x128xf32>
    %209 = arith.negf %208 : vector<8x128xf32>
    %210 = math.exp %209 : vector<8x128xf32>
    %cst_38 = arith.constant 1.000000e+00 : f32
    %211 = vector.broadcast %cst_38 : f32 to vector<8x128xf32>
    %212 = arith.addf %211, %210 : vector<8x128xf32>
    %213 = arith.divf %211, %212 : vector<8x128xf32>
    %214 = vector.extract_strided_slice %207 {offsets = [0, 128], sizes = [8, 128], strides = [1, 1]} : vector<8x512xf32> to vector<8x128xf32>
    %215 = arith.negf %214 : vector<8x128xf32>
    %216 = math.exp %215 : vector<8x128xf32>
    %cst_39 = arith.constant 1.000000e+00 : f32
    %217 = vector.broadcast %cst_39 : f32 to vector<8x128xf32>
    %218 = arith.addf %217, %216 : vector<8x128xf32>
    %219 = arith.divf %217, %218 : vector<8x128xf32>
    %220 = vector.extract_strided_slice %207 {offsets = [0, 256], sizes = [8, 128], strides = [1, 1]} : vector<8x512xf32> to vector<8x128xf32>
    %221 = math.tanh %220 : vector<8x128xf32>
    %222 = vector.extract_strided_slice %207 {offsets = [0, 384], sizes = [8, 128], strides = [1, 1]} : vector<8x512xf32> to vector<8x128xf32>
    %223 = arith.negf %222 : vector<8x128xf32>
    %224 = math.exp %223 : vector<8x128xf32>
    %cst_40 = arith.constant 1.000000e+00 : f32
    %225 = vector.broadcast %cst_40 : f32 to vector<8x128xf32>
    %226 = arith.addf %225, %224 : vector<8x128xf32>
    %227 = arith.divf %225, %226 : vector<8x128xf32>
    %228 = arith.mulf %219, %202 : vector<8x128xf32>
    %229 = arith.mulf %213, %221 : vector<8x128xf32>
    %230 = arith.addf %228, %229 : vector<8x128xf32>
    %231 = math.tanh %230 : vector<8x128xf32>
    %232 = arith.mulf %227, %231 : vector<8x128xf32>
    %c0_41 = arith.constant 0 : index
    %c0_42 = arith.constant 0 : index
    %233 = vector.load %arg4[%c0_41, %c0_42] : memref<128x128xf32, #tpu.memory_space<vmem>>, vector<128x128xf32>
    %cst_43 = arith.constant dense<0.000000e+00> : vector<8x128xf32>
    %234 = tpu.matmul %232, %233, %cst_43 {dimension_numbers = #tpu.dot_dimension_numbers<[1], [0], [0], [1], [0, 0, 1, 1], [], []>} : vector<8x128xf32>, vector<128x128xf32>, vector<8x128xf32> -> vector<8x128xf32>
    %c0_44 = arith.constant 0 : index
    %c0_45 = arith.constant 0 : index
    %235 = vector.load %arg5[%c0_44, %c0_45] : memref<1x128xf32, #tpu.memory_space<vmem>>, vector<1x128xf32>
    %236 = vector.broadcast %235 : vector<1x128xf32> to vector<8x128xf32>
    %237 = arith.addf %234, %236 : vector<8x128xf32>
    %c0_46 = arith.constant 0 : index
    %c0_47 = arith.constant 0 : index
    %238 = vector.load %arg6[%c0_46, %c0_47] : memref<8x128xf32, #tpu.memory_space<vmem>>, vector<8x128xf32>
    tpu.vector_store %arg6[%c0_46, %c0_47], %237 {strides = array<i32>} : memref<8x128xf32, #tpu.memory_space<vmem>>, vector<8x128xf32>,
    return
  }
}

</mosaic_0001>

<llo_original>
// kernel: tpu_custom_call.1
$region0: #{tpu_custom_call.1}
  #allocation0 [shape = 'u32[]', space=smem, size = 0x4, offset = 0x4, fixed_abs, tag = 'smem constant byte address 0x4 - core index']
  #allocation1 [shape = 'u32[144,128]{1,0:T(1,128)}', space=vmem, size = 0x12000, scoped, tag = 'internal scratch']
  %s0 = inlined_call_operand.vmem [shape: f32[64,16], index: 0, kind: input, shape index: {}]
  %s1 = inlined_call_operand.vmem [shape: f32[16,512], index: 1, kind: input, shape index: {}]
  %s2 = inlined_call_operand.hbm [shape: f32[128,512], index: 2, kind: input, shape index: {}]
  %s3 = inlined_call_operand.vmem [shape: f32[1,512], index: 3, kind: input, shape index: {}]
  %s4 = inlined_call_operand.hbm [shape: f32[128,128], index: 4, kind: input, shape index: {}]
  %s5 = inlined_call_operand.vmem [shape: f32[1,128], index: 5, kind: input, shape index: {}]
  %s6 = inlined_call_operand.hbm [shape: f32[8,128], index: 6, kind: output, shape index: {}]
  %s7 = sld [smem:[#allocation0]]
  $region42: #{tpu_custom_call.1} parent=0
    _
  %s9 = ssub.s32 1, %s7
  %s10 = scalar_select 0, %s9, %s7
  $region1: #{tpu_custom_call.1} parent=0
    #allocation2 [shape = 'u8[262144]{0}', space=vmem, size = 0x40000, scoped, tag = 'input window, operand 2, single buffered']
    #allocation3 [shape = 's32[1]{0}', space=sflag, size = 0x4, scoped, tag = 'scoped memory for tpu_custom_call.1']
    #allocation4 [shape = 's32[1]{0}', space=sflag, size = 0x4, scoped, tag = 'scoped memory for tpu_custom_call.1']
    #allocation5 [shape = 'u8[65536]{0}', space=vmem, size = 0x10000, scoped, tag = 'input window, operand 4, single buffered']
    #allocation6 [shape = 's32[1]{0}', space=sflag, size = 0x4, scoped, tag = 'scoped memory for tpu_custom_call.1']
    #allocation7 [shape = 'u8[4096]{0}', space=vmem, size = 0x1000, scoped, tag = 'output window, operand 0, single buffered']
    %11 = vsyncpa [#allocation3], 0
    %12 = vsyncpa [#allocation6], 0
    %13 = vsyncpa [#allocation4], 0
    // Predicated region
    $region2: #{tpu_custom_call.1} parent=1 // pred_check
      _
    $region3: #{tpu_custom_call.1} parent=1 // pred_check_branch
      %15 = sbr.rel (0) target = $region5
    $region4: #{tpu_custom_call.1} parent=1 // pred_region
      _
    $region5: #{tpu_custom_call.1} parent=1 // pred_fallthru
      _
    // Predicated region
    $region6: #{tpu_custom_call.1} parent=1 // pred_check
      _
    $region7: #{tpu_custom_call.1} parent=1 // pred_check_branch
      %17 = sbr.rel (0) target = $region9
    $region8: #{tpu_custom_call.1} parent=1 // pred_region
      _
    $region9: #{tpu_custom_call.1} parent=1 // pred_fallthru
      _
    // Predicated region
    $region10: #{tpu_custom_call.1} parent=1 // pred_check
      _
    $region11: #{tpu_custom_call.1} parent=1 // pred_check_branch
      %19 = sbr.rel (0) target = $region13
    $region12: #{tpu_custom_call.1} parent=1 // pred_region
      %s21 = ssub.s32 8192, 8192
      %22 = vsyncadd [#allocation3], %s21
      %s23 = sshll.u32 [#allocation2], 4
      %s24 = int_to_ptr.vmem [resolvable:$true] %s23
      %29 = dma.hbm_to_vmem [thread:$0]  %s2, 8192, %s24, [#allocation3], 512, 512, 32
    $region13: #{tpu_custom_call.1} parent=1 // pred_fallthru
      _
    // Predicated region
    $region14: #{tpu_custom_call.1} parent=1 // pred_check
      _
    $region15: #{tpu_custom_call.1} parent=1 // pred_check_branch
      %31 = sbr.rel (0) target = $region17
    $region16: #{tpu_custom_call.1} parent=1 // pred_region
      _
    $region17: #{tpu_custom_call.1} parent=1 // pred_fallthru
      _
    // Predicated region
    $region18: #{tpu_custom_call.1} parent=1 // pred_check
      _
    $region19: #{tpu_custom_call.1} parent=1 // pred_check_branch
      %33 = sbr.rel (0) target = $region21
    $region20: #{tpu_custom_call.1} parent=1 // pred_region
      %s35 = ssub.s32 2048, 2048
      %36 = vsyncadd [#allocation6], %s35
      %s37 = sshll.u32 [#allocation5], 4
      %s38 = int_to_ptr.vmem [resolvable:$true] %s37
      %43 = dma.hbm_to_vmem [thread:$0]  %s4, 2048, %s38, [#allocation6], 128, 128, 8
    $region21: #{tpu_custom_call.1} parent=1 // pred_fallthru
      _
    // Predicated region
    $region22: #{tpu_custom_call.1} parent=1 // pred_check
      _
    $region23: #{tpu_custom_call.1} parent=1 // pred_check_branch
      %45 = sbr.rel (0) target = $region25
    $region24: #{tpu_custom_call.1} parent=1 // pred_region
      _
    $region25: #{tpu_custom_call.1} parent=1 // pred_fallthru
      _
    // Predicated region
    $region26: #{tpu_custom_call.1} parent=1 // pred_check
      _
    $region27: #{tpu_custom_call.1} parent=1 // pred_check_branch
      %47 = sbr.rel (0) target = $region29
    $region28: #{tpu_custom_call.1} parent=1 // pred_region
      %48 = dma.done [#allocation3], 8192
    $region29: #{tpu_custom_call.1} parent=1 // pred_fallthru
      _
    // Predicated region
    $region30: #{tpu_custom_call.1} parent=1 // pred_check
      _
    $region31: #{tpu_custom_call.1} parent=1 // pred_check_branch
      %50 = sbr.rel (0) target = $region33
    $region32: #{tpu_custom_call.1} parent=1 // pred_region
      %51 = dma.done [#allocation6], 2048
    $region33: #{tpu_custom_call.1} parent=1 // pred_fallthru
      _
    %v52 = vld [vmem:[%s0] sm:$0xff]
    %v53 = vld [vmem:[%s0 + $0x8] sm:$0xff]
    %v54 = vld [vmem:[%s0 + $0x10] sm:$0xff]
    %v55 = vld [vmem:[%s0 + $0x18] sm:$0xff]
    %v56 = vld [vmem:[%s0 + $0x20] sm:$0xff]
    %v57 = vld [vmem:[%s0 + $0x28] sm:$0xff]
    %v58 = vld [vmem:[%s0 + $0x30] sm:$0xff]
    %v59 = vld [vmem:[%s0 + $0x38] sm:$0xff]
    %v60 = vld [vmem:[%s1] sm:$0xff]
    %v61 = vld [vmem:[%s1 + $0x8] sm:$0xff]
    %v62 = vld [vmem:[%s1 + $0x10] sm:$0xff]
    %v63 = vld [vmem:[%s1 + $0x18] sm:$0xff]
    %v64 = vld [vmem:[%s1 + $0x20] sm:$0xff]
    %v65 = vld [vmem:[%s1 + $0x28] sm:$0xff]
    %v66 = vld [vmem:[%s1 + $0x30] sm:$0xff]
    %v67 = vld [vmem:[%s1 + $0x38] sm:$0xff]
    %v68 = vld [vmem:[%s3] sm:$0xf]
    %v70 = vlaneseq
    %v71 = vshrl.u32 %v70, 7
    %v72 = vsub.s32 0, %v71
    %v73 = vrot.slane %v68, %v72
    %v74 = vlaneseq
    %v75 = vshrl.u32 %v74, 7
    %v76 = vsub.s32 1, %v75
    %v77 = vrot.slane %v68, %v76
    %v78 = vlaneseq
    %v79 = vshrl.u32 %v78, 7
    %v80 = vsub.s32 2, %v79
    %v81 = vrot.slane %v68, %v80
    %v82 = vlaneseq
    %v83 = vshrl.u32 %v82, 7
    %v84 = vsub.s32 3, %v83
    %v85 = vrot.slane %v68, %v84
    %vm90 = vcmask 130048
    %v92 = vsel %vm90, %v52, 0
    %v95 = vsel %vm90, %v53, 0
    %v98 = vsel %vm90, %v54, 0
    %v101 = vsel %vm90, %v55, 0
    %v104 = vsel %vm90, %v56, 0
    %v107 = vsel %vm90, %v57, 0
    %v110 = vsel %vm90, %v58, 0
    %v113 = vsel %vm90, %v59, 0
    %115 = vmatprep.subr.mxu0 0.0
    %116 = vmatpush1.msra.mxu0 0.0
    %117 = vmatprep.subr.mxu0 0.0
    %118 = vmatpush1.msra.mxu0 0.0
    %119 = vmatprep.subr.mxu0 0.0
    %120 = vmatpush1.msra.mxu0 0.0
    %121 = vmatprep.subr.mxu0 0.0
    %122 = vmatpush1.msra.mxu0 0.0
    %123 = vmatprep.subr.mxu0 0.0
    %124 = vmatpush1.msra.mxu0 0.0
    %125 = vmatprep.subr.mxu0 0.0
    %126 = vmatpush1.msra.mxu0 0.0
    %127 = vmatprep.subr.mxu0 0.0
    %128 = vmatpush1.msra.mxu0 0.0
    %129 = vmatprep.subr.mxu0 0.0
    %130 = vmatpush1.msra.mxu0 0.0
    %131 = vmatprep.subr.mxu0 0.0
    %132 = vmatpush1.msra.mxu0 0.0
    %133 = vmatprep.subr.mxu0 0.0
    %134 = vmatpush1.msra.mxu0 0.0
    %135 = vmatprep.subr.mxu0 0.0
    %136 = vmatpush1.msra.mxu0 0.0
    %137 = vmatprep.subr.mxu0 0.0
    %138 = vmatpush1.msra.mxu0 0.0
    %139 = vmatprep.subr.mxu0 0.0
    %140 = vmatpush1.msra.mxu0 0.0
    %141 = vmatprep.subr.mxu0 0.0
    %142 = vmatpush1.msra.mxu0 0.0
    %143 = vmatprep.subr.mxu0 %v65
    %144 = vmatpush1.msra.mxu0 %v64
    %145 = vmatprep.subr.mxu0 %v61
    %146 = vmatpush1.msra.mxu0 %v60
    %147 = vmatprep.subr.mxu0 0.0
    %148 = vmatpush2.msra.mxu0 0.0
    %149 = vmatprep.subr.mxu0 0.0
    %150 = vmatpush2.msra.mxu0 0.0
    %151 = vmatprep.subr.mxu0 0.0
    %152 = vmatpush2.msra.mxu0 0.0
    %153 = vmatprep.subr.mxu0 0.0
    %154 = vmatpush2.msra.mxu0 0.0
    %155 = vmatprep.subr.mxu0 0.0
    %156 = vmatpush2.msra.mxu0 0.0
    %157 = vmatprep.subr.mxu0 0.0
    %158 = vmatpush2.msra.mxu0 0.0
    %159 = vmatprep.subr.mxu0 0.0
    %160 = vmatpush2.msra.mxu0 0.0
    %161 = vmatprep.subr.mxu0 0.0
    %162 = vmatpush2.msra.mxu0 0.0
    %163 = vmatprep.subr.mxu0 0.0
    %164 = vmatpush2.msra.mxu0 0.0
    %165 = vmatprep.subr.mxu0 0.0
    %166 = vmatpush2.msra.mxu0 0.0
    %167 = vmatprep.subr.mxu0 0.0
    %168 = vmatpush2.msra.mxu0 0.0
    %169 = vmatprep.subr.mxu0 0.0
    %170 = vmatpush2.msra.mxu0 0.0
    %171 = vmatprep.subr.mxu0 0.0
    %172 = vmatpush2.msra.mxu0 0.0
    %173 = vmatprep.subr.mxu0 0.0
    %174 = vmatpush2.msra.mxu0 0.0
    %175 = vmatprep.subr.mxu0 0.0
    %176 = vmatpush2.msra.mxu0 0.0
    %177 = vmatprep.subr.mxu0 0.0
    %178 = vmatpush2.msra.mxu0 0.0
    %179 = vmatprep.mubr.f32.mxu0 0.0
    %180 = vmatmul.mubr.f32.gmra.mxu0 %v92
    %v181 = vpop.f32.mrf.mxu0
    %v182 = vadd.f32 %v73, %v181
    %v183 = vpop.f32.mrf.mxu0
    %v184 = vadd.f32 %v77, %v183
    %185 = vmatprep.mubr.f32.mxu0 0.0
    %186 = vmatmul.mubr.f32.gmra.mxu0 %v95
    %v187 = vpop.f32.mrf.mxu0
    %v188 = vadd.f32 %v73, %v187
    %v189 = vpop.f32.mrf.mxu0
    %v190 = vadd.f32 %v77, %v189
    %191 = vmatprep.mubr.f32.mxu0 0.0
    %192 = vmatmul.mubr.f32.gmra.mxu0 %v98
    %v193 = vpop.f32.mrf.mxu0
    %v194 = vadd.f32 %v73, %v193
    %v195 = vpop.f32.mrf.mxu0
    %v196 = vadd.f32 %v77, %v195
    %197 = vmatprep.mubr.f32.mxu0 0.0
    %198 = vmatmul.mubr.f32.gmra.mxu0 %v101
    %v199 = vpop.f32.mrf.mxu0
    %v200 = vadd.f32 %v73, %v199
    %v201 = vpop.f32.mrf.mxu0
    %v202 = vadd.f32 %v77, %v201
    %203 = vmatprep.mubr.f32.mxu0 0.0
    %204 = vmatmul.mubr.f32.gmra.mxu0 %v104
    %v205 = vpop.f32.mrf.mxu0
    %v206 = vadd.f32 %v73, %v205
    %v207 = vpop.f32.mrf.mxu0
    %v208 = vadd.f32 %v77, %v207
    %209 = vmatprep.mubr.f32.mxu0 0.0
    %210 = vmatmul.mubr.f32.gmra.mxu0 %v107
    %v211 = vpop.f32.mrf.mxu0
    %v212 = vadd.f32 %v73, %v211
    %v213 = vpop.f32.mrf.mxu0
    %v214 = vadd.f32 %v77, %v213
    %215 = vmatprep.mubr.f32.mxu0 0.0
    %216 = vmatmul.mubr.f32.gmra.mxu0 %v110
    %v217 = vpop.f32.mrf.mxu0
    %v218 = vadd.f32 %v73, %v217
    %v219 = vpop.f32.mrf.mxu0
    %v220 = vadd.f32 %v77, %v219
    %221 = vmatprep.mubr.f32.mxu0 0.0
    %222 = vmatmul.mubr.f32.gmra.mxu0 %v113
    %v223 = vpop.f32.mrf.mxu0
    %v224 = vadd.f32 %v73, %v223
    %v225 = vpop.f32.mrf.mxu0
    %v226 = vadd.f32 %v77, %v225
    %227 = vdwg.mxu0
    %228 = vmatprep.subr.mxu0 0.0
    %229 = vmatpush1.msra.mxu0 0.0
    %230 = vmatprep.subr.mxu0 0.0
    %231 = vmatpush1.msra.mxu0 0.0
    %232 = vmatprep.subr.mxu0 0.0
    %233 = vmatpush1.msra.mxu0 0.0
    %234 = vmatprep.subr.mxu0 0.0
    %235 = vmatpush1.msra.mxu0 0.0
    %236 = vmatprep.subr.mxu0 0.0
    %237 = vmatpush1.msra.mxu0 0.0
    %238 = vmatprep.subr.mxu0 0.0
    %239 = vmatpush1.msra.mxu0 0.0
    %240 = vmatprep.subr.mxu0 0.0
    %241 = vmatpush1.msra.mxu0 0.0
    %242 = vmatprep.subr.mxu0 0.0
    %243 = vmatpush1.msra.mxu0 0.0
    %244 = vmatprep.subr.mxu0 0.0
    %245 = vmatpush1.msra.mxu0 0.0
    %246 = vmatprep.subr.mxu0 0.0
    %247 = vmatpush1.msra.mxu0 0.0
    %248 = vmatprep.subr.mxu0 0.0
    %249 = vmatpush1.msra.mxu0 0.0
    %250 = vmatprep.subr.mxu0 0.0
    %251 = vmatpush1.msra.mxu0 0.0
    %252 = vmatprep.subr.mxu0 0.0
    %253 = vmatpush1.msra.mxu0 0.0
    %254 = vmatprep.subr.mxu0 0.0
    %255 = vmatpush1.msra.mxu0 0.0
    %256 = vmatprep.subr.mxu0 %v67
    %257 = vmatpush1.msra.mxu0 %v66
    %258 = vmatprep.subr.mxu0 %v63
    %259 = vmatpush1.msra.mxu0 %v62
    %260 = vmatprep.subr.mxu0 0.0
    %261 = vmatpush2.msra.mxu0 0.0
    %262 = vmatprep.subr.mxu0 0.0
    %263 = vmatpush2.msra.mxu0 0.0
    %264 = vmatprep.subr.mxu0 0.0
    %265 = vmatpush2.msra.mxu0 0.0
    %266 = vmatprep.subr.mxu0 0.0
    %267 = vmatpush2.msra.mxu0 0.0
    %268 = vmatprep.subr.mxu0 0.0
    %269 = vmatpush2.msra.mxu0 0.0
    %270 = vmatprep.subr.mxu0 0.0
    %271 = vmatpush2.msra.mxu0 0.0
    %272 = vmatprep.subr.mxu0 0.0
    %273 = vmatpush2.msra.mxu0 0.0
    %274 = vmatprep.subr.mxu0 0.0
    %275 = vmatpush2.msra.mxu0 0.0
    %276 = vmatprep.subr.mxu0 0.0
    %277 = vmatpush2.msra.mxu0 0.0
    %278 = vmatprep.subr.mxu0 0.0
    %279 = vmatpush2.msra.mxu0 0.0
    %280 = vmatprep.subr.mxu0 0.0
    %281 = vmatpush2.msra.mxu0 0.0
    %282 = vmatprep.subr.mxu0 0.0
    %283 = vmatpush2.msra.mxu0 0.0
    %284 = vmatprep.subr.mxu0 0.0
    %285 = vmatpush2.msra.mxu0 0.0
    %286 = vmatprep.subr.mxu0 0.0
    %287 = vmatpush2.msra.mxu0 0.0
    %288 = vmatprep.subr.mxu0 0.0
    %289 = vmatpush2.msra.mxu0 0.0
    %290 = vmatprep.subr.mxu0 0.0
    %291 = vmatpush2.msra.mxu0 0.0
    %292 = vmatprep.mubr.f32.mxu0 0.0
    %293 = vmatmul.mubr.f32.gmra.mxu0 %v92
    %v294 = vpop.f32.mrf.mxu0
    %v295 = vadd.f32 %v81, %v294
    %v296 = vpop.f32.mrf.mxu0
    %v297 = vadd.f32 %v85, %v296
    %298 = vmatprep.mubr.f32.mxu0 0.0
    %299 = vmatmul.mubr.f32.gmra.mxu0 %v95
    %v300 = vpop.f32.mrf.mxu0
    %v301 = vadd.f32 %v81, %v300
    %v302 = vpop.f32.mrf.mxu0
    %v303 = vadd.f32 %v85, %v302
    %304 = vmatprep.mubr.f32.mxu0 0.0
    %305 = vmatmul.mubr.f32.gmra.mxu0 %v98
    %v306 = vpop.f32.mrf.mxu0
    %v307 = vadd.f32 %v81, %v306
    %v308 = vpop.f32.mrf.mxu0
    %v309 = vadd.f32 %v85, %v308
    %310 = vmatprep.mubr.f32.mxu0 0.0
    %311 = vmatmul.mubr.f32.gmra.mxu0 %v101
    %v312 = vpop.f32.mrf.mxu0
    %v313 = vadd.f32 %v81, %v312
    %v314 = vpop.f32.mrf.mxu0
    %v315 = vadd.f32 %v85, %v314
    %316 = vmatprep.mubr.f32.mxu0 0.0
    %317 = vmatmul.mubr.f32.gmra.mxu0 %v104
    %v318 = vpop.f32.mrf.mxu0
    %v319 = vadd.f32 %v81, %v318
    %v320 = vpop.f32.mrf.mxu0
    %v321 = vadd.f32 %v85, %v320
    %322 = vmatprep.mubr.f32.mxu0 0.0
    %323 = vmatmul.mubr.f32.gmra.mxu0 %v107
    %v324 = vpop.f32.mrf.mxu0
    %v325 = vadd.f32 %v81, %v324
    %v326 = vpop.f32.mrf.mxu0
    %v327 = vadd.f32 %v85, %v326
    %328 = vmatprep.mubr.f32.mxu0 0.0
    %329 = vmatmul.mubr.f32.gmra.mxu0 %v110
    %v330 = vpop.f32.mrf.mxu0
    %v331 = vadd.f32 %v81, %v330
    %v332 = vpop.f32.mrf.mxu0
    %v333 = vadd.f32 %v85, %v332
    %334 = vmatprep.mubr.f32.mxu0 0.0
    %335 = vmatmul.mubr.f32.gmra.mxu0 %v113
    %v336 = vpop.f32.mrf.mxu0
    %v337 = vadd.f32 %v81, %v336
    %v338 = vpop.f32.mrf.mxu0
    %v339 = vadd.f32 %v85, %v338
    %340 = vdwg.mxu0
    %v341 = vld [vmem:[#allocation2] sm:$0xff]
    %v342 = vld [vmem:[#allocation2 + $0x8] sm:$0xff]
    %v343 = vld [vmem:[#allocation2 + $0x10] sm:$0xff]
    %v344 = vld [vmem:[#allocation2 + $0x18] sm:$0xff]
    %v345 = vld [vmem:[#allocation2 + $0x20] sm:$0xff]
    %v346 = vld [vmem:[#allocation2 + $0x28] sm:$0xff]
    %v347 = vld [vmem:[#allocation2 + $0x30] sm:$0xff]
    %v348 = vld [vmem:[#allocation2 + $0x38] sm:$0xff]
    %v349 = vld [vmem:[#allocation2 + $0x40] sm:$0xff]
    %v350 = vld [vmem:[#allocation2 + $0x48] sm:$0xff]
    %v351 = vld [vmem:[#allocation2 + $0x50] sm:$0xff]
    %v352 = vld [vmem:[#allocation2 + $0x58] sm:$0xff]
    %v353 = vld [vmem:[#allocation2 + $0x60] sm:$0xff]
    %v354 = vld [vmem:[#allocation2 + $0x68] sm:$0xff]
    %v355 = vld [vmem:[#allocation2 + $0x70] sm:$0xff]
    %v356 = vld [vmem:[#allocation2 + $0x78] sm:$0xff]
    %v357 = vld [vmem:[#allocation2 + $0x80] sm:$0xff]
    %v358 = vld [vmem:[#allocation2 + $0x88] sm:$0xff]
    %v359 = vld [vmem:[#allocation2 + $0x90] sm:$0xff]
    %v360 = vld [vmem:[#allocation2 + $0x98] sm:$0xff]
    %v361 = vld [vmem:[#allocation2 + $0xa0] sm:$0xff]
    %v362 = vld [vmem:[#allocation2 + $0xa8] sm:$0xff]
    %v363 = vld [vmem:[#allocation2 + $0xb0] sm:$0xff]
    %v364 = vld [vmem:[#allocation2 + $0xb8] sm:$0xff]
    %v365 = vld [vmem:[#allocation2 + $0xc0] sm:$0xff]
    %v366 = vld [vmem:[#allocation2 + $0xc8] sm:$0xff]
    %v367 = vld [vmem:[#allocation2 + $0xd0] sm:$0xff]
    %v368 = vld [vmem:[#allocation2 + $0xd8] sm:$0xff]
    %v369 = vld [vmem:[#allocation2 + $0xe0] sm:$0xff]
    %v370 = vld [vmem:[#allocation2 + $0xe8] sm:$0xff]
    %v371 = vld [vmem:[#allocation2 + $0xf0] sm:$0xff]
    %v372 = vld [vmem:[#allocation2 + $0xf8] sm:$0xff]
    %v373 = vld [vmem:[#allocation2 + $0x100] sm:$0xff]
    %v374 = vld [vmem:[#allocation2 + $0x108] sm:$0xff]
    %v375 = vld [vmem:[#allocation2 + $0x110] sm:$0xff]
    %v376 = vld [vmem:[#allocation2 + $0x118] sm:$0xff]
    %v377 = vld [vmem:[#allocation2 + $0x120] sm:$0xff]
    %v378 = vld [vmem:[#allocation2 + $0x128] sm:$0xff]
    %v379 = vld [vmem:[#allocation2 + $0x130] sm:$0xff]
    %v380 = vld [vmem:[#allocation2 + $0x138] sm:$0xff]
    %v381 = vld [vmem:[#allocation2 + $0x140] sm:$0xff]
    %v382 = vld [vmem:[#allocation2 + $0x148] sm:$0xff]
    %v383 = vld [vmem:[#allocation2 + $0x150] sm:$0xff]
    %v384 = vld [vmem:[#allocation2 + $0x158] sm:$0xff]
    %v385 = vld [vmem:[#allocation2 + $0x160] sm:$0xff]
    %v386 = vld [vmem:[#allocation2 + $0x168] sm:$0xff]
    %v387 = vld [vmem:[#allocation2 + $0x170] sm:$0xff]
    %v388 = vld [vmem:[#allocation2 + $0x178] sm:$0xff]
    %v389 = vld [vmem:[#allocation2 + $0x180] sm:$0xff]
    %v390 = vld [vmem:[#allocation2 + $0x188] sm:$0xff]
    %v391 = vld [vmem:[#allocation2 + $0x190] sm:$0xff]
    %v392 = vld [vmem:[#allocation2 + $0x198] sm:$0xff]
    %v393 = vld [vmem:[#allocation2 + $0x1a0] sm:$0xff]
    %v394 = vld [vmem:[#allocation2 + $0x1a8] sm:$0xff]
    %v395 = vld [vmem:[#allocation2 + $0x1b0] sm:$0xff]
    %v396 = vld [vmem:[#allocation2 + $0x1b8] sm:$0xff]
    %v397 = vld [vmem:[#allocation2 + $0x1c0] sm:$0xff]
    %v398 = vld [vmem:[#allocation2 + $0x1c8] sm:$0xff]
    %v399 = vld [vmem:[#allocation2 + $0x1d0] sm:$0xff]
    %v400 = vld [vmem:[#allocation2 + $0x1d8] sm:$0xff]
    %v401 = vld [vmem:[#allocation2 + $0x1e0] sm:$0xff]
    %v402 = vld [vmem:[#allocation2 + $0x1e8] sm:$0xff]
    %v403 = vld [vmem:[#allocation2 + $0x1f0] sm:$0xff]
    %v404 = vld [vmem:[#allocation2 + $0x1f8] sm:$0xff]
    %405 = vmatprep.subr.mxu0 %v402
    %406 = vmatpush1.msra.mxu0 %v401
    %407 = vmatprep.subr.mxu0 %v398
    %408 = vmatpush1.msra.mxu0 %v397
    %409 = vmatprep.subr.mxu0 %v394
    %410 = vmatpush1.msra.mxu0 %v393
    %411 = vmatprep.subr.mxu0 %v390
    %412 = vmatpush1.msra.mxu0 %v389
    %413 = vmatprep.subr.mxu0 %v386
    %414 = vmatpush1.msra.mxu0 %v385
    %415 = vmatprep.subr.mxu0 %v382
    %416 = vmatpush1.msra.mxu0 %v381
    %417 = vmatprep.subr.mxu0 %v378
    %418 = vmatpush1.msra.mxu0 %v377
    %419 = vmatprep.subr.mxu0 %v374
    %420 = vmatpush1.msra.mxu0 %v373
    %421 = vmatprep.subr.mxu0 %v370
    %422 = vmatpush1.msra.mxu0 %v369
    %423 = vmatprep.subr.mxu0 %v366
    %424 = vmatpush1.msra.mxu0 %v365
    %425 = vmatprep.subr.mxu0 %v362
    %426 = vmatpush1.msra.mxu0 %v361
    %427 = vmatprep.subr.mxu0 %v358
    %428 = vmatpush1.msra.mxu0 %v357
    %429 = vmatprep.subr.mxu0 %v354
    %430 = vmatpush1.msra.mxu0 %v353
    %431 = vmatprep.subr.mxu0 %v350
    %432 = vmatpush1.msra.mxu0 %v349
    %433 = vmatprep.subr.mxu0 %v346
    %434 = vmatpush1.msra.mxu0 %v345
    %435 = vmatprep.subr.mxu0 %v342
    %436 = vmatpush1.msra.mxu0 %v341
    %437 = vmatprep.subr.mxu0 0.0
    %438 = vmatpush2.msra.mxu0 0.0
    %439 = vmatprep.subr.mxu0 0.0
    %440 = vmatpush2.msra.mxu0 0.0
    %441 = vmatprep.subr.mxu0 0.0
    %442 = vmatpush2.msra.mxu0 0.0
    %443 = vmatprep.subr.mxu0 0.0
    %444 = vmatpush2.msra.mxu0 0.0
    %445 = vmatprep.subr.mxu0 0.0
    %446 = vmatpush2.msra.mxu0 0.0
    %447 = vmatprep.subr.mxu0 0.0
    %448 = vmatpush2.msra.mxu0 0.0
    %449 = vmatprep.subr.mxu0 0.0
    %450 = vmatpush2.msra.mxu0 0.0
    %451 = vmatprep.subr.mxu0 0.0
    %452 = vmatpush2.msra.mxu0 0.0
    %453 = vmatprep.subr.mxu0 0.0
    %454 = vmatpush2.msra.mxu0 0.0
    %455 = vmatprep.subr.mxu0 0.0
    %456 = vmatpush2.msra.mxu0 0.0
    %457 = vmatprep.subr.mxu0 0.0
    %458 = vmatpush2.msra.mxu0 0.0
    %459 = vmatprep.subr.mxu0 0.0
    %460 = vmatpush2.msra.mxu0 0.0
    %461 = vmatprep.subr.mxu0 0.0
    %462 = vmatpush2.msra.mxu0 0.0
    %463 = vmatprep.subr.mxu0 0.0
    %464 = vmatpush2.msra.mxu0 0.0
    %465 = vmatprep.subr.mxu0 0.0
    %466 = vmatpush2.msra.mxu0 0.0
    %467 = vmatprep.subr.mxu0 0.0
    %468 = vmatpush2.msra.mxu0 0.0
    %469 = vmatprep.mubr.f32.mxu0 0.0
    %470 = vmatmul.mubr.f32.gmra.mxu0 0.0
    %v471 = vpop.f32.mrf.mxu0
    %v472 = vadd.f32 0.0, %v471
    %v473 = vpop.f32.mrf.mxu0
    %v474 = vadd.f32 0.0, %v473
    %475 = vdwg.mxu0
    %476 = vmatprep.subr.mxu0 %v404
    %477 = vmatpush1.msra.mxu0 %v403
    %478 = vmatprep.subr.mxu0 %v400
    %479 = vmatpush1.msra.mxu0 %v399
    %480 = vmatprep.subr.mxu0 %v396
    %481 = vmatpush1.msra.mxu0 %v395
    %482 = vmatprep.subr.mxu0 %v392
    %483 = vmatpush1.msra.mxu0 %v391
    %484 = vmatprep.subr.mxu0 %v388
    %485 = vmatpush1.msra.mxu0 %v387
    %486 = vmatprep.subr.mxu0 %v384
    %487 = vmatpush1.msra.mxu0 %v383
    %488 = vmatprep.subr.mxu0 %v380
    %489 = vmatpush1.msra.mxu0 %v379
    %490 = vmatprep.subr.mxu0 %v376
    %491 = vmatpush1.msra.mxu0 %v375
    %492 = vmatprep.subr.mxu0 %v372
    %493 = vmatpush1.msra.mxu0 %v371
    %494 = vmatprep.subr.mxu0 %v368
    %495 = vmatpush1.msra.mxu0 %v367
    %496 = vmatprep.subr.mxu0 %v364
    %497 = vmatpush1.msra.mxu0 %v363
    %498 = vmatprep.subr.mxu0 %v360
    %499 = vmatpush1.msra.mxu0 %v359
    %500 = vmatprep.subr.mxu0 %v356
    %501 = vmatpush1.msra.mxu0 %v355
    %502 = vmatprep.subr.mxu0 %v352
    %503 = vmatpush1.msra.mxu0 %v351
    %504 = vmatprep.subr.mxu0 %v348
    %505 = vmatpush1.msra.mxu0 %v347
    %506 = vmatprep.subr.mxu0 %v344
    %507 = vmatpush1.msra.mxu0 %v343
    %508 = vmatprep.subr.mxu0 0.0
    %509 = vmatpush2.msra.mxu0 0.0
    %510 = vmatprep.subr.mxu0 0.0
    %511 = vmatpush2.msra.mxu0 0.0
    %512 = vmatprep.subr.mxu0 0.0
    %513 = vmatpush2.msra.mxu0 0.0
    %514 = vmatprep.subr.mxu0 0.0
    %515 = vmatpush2.msra.mxu0 0.0
    %516 = vmatprep.subr.mxu0 0.0
    %517 = vmatpush2.msra.mxu0 0.0
    %518 = vmatprep.subr.mxu0 0.0
    %519 = vmatpush2.msra.mxu0 0.0
    %520 = vmatprep.subr.mxu0 0.0
    %521 = vmatpush2.msra.mxu0 0.0
    %522 = vmatprep.subr.mxu0 0.0
    %523 = vmatpush2.msra.mxu0 0.0
    %524 = vmatprep.subr.mxu0 0.0
    %525 = vmatpush2.msra.mxu0 0.0
    %526 = vmatprep.subr.mxu0 0.0
    %527 = vmatpush2.msra.mxu0 0.0
    %528 = vmatprep.subr.mxu0 0.0
    %529 = vmatpush2.msra.mxu0 0.0
    %530 = vmatprep.subr.mxu0 0.0
    %531 = vmatpush2.msra.mxu0 0.0
    %532 = vmatprep.subr.mxu0 0.0
    %533 = vmatpush2.msra.mxu0 0.0
    %534 = vmatprep.subr.mxu0 0.0
    %535 = vmatpush2.msra.mxu0 0.0
    %536 = vmatprep.subr.mxu0 0.0
    %537 = vmatpush2.msra.mxu0 0.0
    %538 = vmatprep.subr.mxu0 0.0
    %539 = vmatpush2.msra.mxu0 0.0
    %540 = vmatprep.mubr.f32.mxu0 0.0
    %541 = vmatmul.mubr.f32.gmra.mxu0 0.0
    %v542 = vpop.f32.mrf.mxu0
    %v543 = vadd.f32 0.0, %v542
    %v544 = vpop.f32.mrf.mxu0
    %v545 = vadd.f32 0.0, %v544
    %546 = vdwg.mxu0
    %v547 = vadd.f32 %v182, %v472
    %v548 = vadd.f32 %v184, %v474
    %v549 = vadd.f32 %v295, %v543
    %v550 = vadd.f32 %v297, %v545
    %v551 = vxor.u32 %v547, 2147483648
    %v552 = vmul.f32 %v551, 1.442695
    %v553 = vpow.pop %v552
    %v554 = vadd.f32 %v553, 1.0
    %v555 = vrcp.pop %v554
    %v556 = vmul.f32 1.0, %v555
    %v557 = vxor.u32 %v548, 2147483648
    %v558 = vmul.f32 %v557, 1.442695
    %v559 = vpow.pop %v558
    %v560 = vadd.f32 %v559, 1.0
    %v561 = vrcp.pop %v560
    %v562 = vmul.f32 1.0, %v561
    %v563 = vtanh.pop %v549
    %v564 = vxor.u32 %v550, 2147483648
    %v565 = vmul.f32 %v564, 1.442695
    %v566 = vpow.pop %v565
    %v567 = vadd.f32 %v566, 1.0
    %v568 = vrcp.pop %v567
    %v569 = vmul.f32 1.0, %v568
    %v570 = vmul.f32 %v562, 0.0
    %v571 = vmul.f32 %v556, %v563
    %v572 = vadd.f32 %v570, %v571
    %v573 = vtanh.pop %v572
    %v574 = vmul.f32 %v569, %v573
    %575 = vmatprep.subr.mxu0 %v402
    %576 = vmatpush1.msra.mxu0 %v401
    %577 = vmatprep.subr.mxu0 %v398
    %578 = vmatpush1.msra.mxu0 %v397
    %579 = vmatprep.subr.mxu0 %v394
    %580 = vmatpush1.msra.mxu0 %v393
    %581 = vmatprep.subr.mxu0 %v390
    %582 = vmatpush1.msra.mxu0 %v389
    %583 = vmatprep.subr.mxu0 %v386
    %584 = vmatpush1.msra.mxu0 %v385
    %585 = vmatprep.subr.mxu0 %v382
    %586 = vmatpush1.msra.mxu0 %v381
    %587 = vmatprep.subr.mxu0 %v378
    %588 = vmatpush1.msra.mxu0 %v377
    %589 = vmatprep.subr.mxu0 %v374
    %590 = vmatpush1.msra.mxu0 %v373
    %591 = vmatprep.subr.mxu0 %v370
    %592 = vmatpush1.msra.mxu0 %v369
    %593 = vmatprep.subr.mxu0 %v366
    %594 = vmatpush1.msra.mxu0 %v365
    %595 = vmatprep.subr.mxu0 %v362
    %596 = vmatpush1.msra.mxu0 %v361
    %597 = vmatprep.subr.mxu0 %v358
    %598 = vmatpush1.msra.mxu0 %v357
    %599 = vmatprep.subr.mxu0 %v354
    %600 = vmatpush1.msra.mxu0 %v353
    %601 = vmatprep.subr.mxu0 %v350
    %602 = vmatpush1.msra.mxu0 %v349
    %603 = vmatprep.subr.mxu0 %v346
    %604 = vmatpush1.msra.mxu0 %v345
    %605 = vmatprep.subr.mxu0 %v342
    %606 = vmatpush1.msra.mxu0 %v341
    %607 = vmatprep.subr.mxu0 0.0
    %608 = vmatpush2.msra.mxu0 0.0
    %609 = vmatprep.subr.mxu0 0.0
    %610 = vmatpush2.msra.mxu0 0.0
    %611 = vmatprep.subr.mxu0 0.0
    %612 = vmatpush2.msra.mxu0 0.0
    %613 = vmatprep.subr.mxu0 0.0
    %614 = vmatpush2.msra.mxu0 0.0
    %615 = vmatprep.subr.mxu0 0.0
    %616 = vmatpush2.msra.mxu0 0.0
    %617 = vmatprep.subr.mxu0 0.0
    %618 = vmatpush2.msra.mxu0 0.0
    %619 = vmatprep.subr.mxu0 0.0
    %620 = vmatpush2.msra.mxu0 0.0
    %621 = vmatprep.subr.mxu0 0.0
    %622 = vmatpush2.msra.mxu0 0.0
    %623 = vmatprep.subr.mxu0 0.0
    %624 = vmatpush2.msra.mxu0 0.0
    %625 = vmatprep.subr.mxu0 0.0
    %626 = vmatpush2.msra.mxu0 0.0
    %627 = vmatprep.subr.mxu0 0.0
    %628 = vmatpush2.msra.mxu0 0.0
    %629 = vmatprep.subr.mxu0 0.0
    %630 = vmatpush2.msra.mxu0 0.0
    %631 = vmatprep.subr.mxu0 0.0
    %632 = vmatpush2.msra.mxu0 0.0
    %633 = vmatprep.subr.mxu0 0.0
    %634 = vmatpush2.msra.mxu0 0.0
    %635 = vmatprep.subr.mxu0 0.0
    %636 = vmatpush2.msra.mxu0 0.0
    %637 = vmatprep.subr.mxu0 0.0
    %638 = vmatpush2.msra.mxu0 0.0
    %639 = vmatprep.mubr.f32.mxu0 0.0
    %640 = vmatmul.mubr.f32.gmra.mxu0 %v574
    %v641 = vpop.f32.mrf.mxu0
    %v642 = vadd.f32 0.0, %v641
    %v643 = vpop.f32.mrf.mxu0
    %v644 = vadd.f32 0.0, %v643
    %645 = vdwg.mxu0
    %646 = vmatprep.subr.mxu0 %v404
    %647 = vmatpush1.msra.mxu0 %v403
    %648 = vmatprep.subr.mxu0 %v400
    %649 = vmatpush1.msra.mxu0 %v399
    %650 = vmatprep.subr.mxu0 %v396
    %651 = vmatpush1.msra.mxu0 %v395
    %652 = vmatprep.subr.mxu0 %v392
    %653 = vmatpush1.msra.mxu0 %v391
    %654 = vmatprep.subr.mxu0 %v388
    %655 = vmatpush1.msra.mxu0 %v387
    %656 = vmatprep.subr.mxu0 %v384
    %657 = vmatpush1.msra.mxu0 %v383
    %658 = vmatprep.subr.mxu0 %v380
    %659 = vmatpush1.msra.mxu0 %v379
    %660 = vmatprep.subr.mxu0 %v376
    %661 = vmatpush1.msra.mxu0 %v375
    %662 = vmatprep.subr.mxu0 %v372
    %663 = vmatpush1.msra.mxu0 %v371
    %664 = vmatprep.subr.mxu0 %v368
    %665 = vmatpush1.msra.mxu0 %v367
    %666 = vmatprep.subr.mxu0 %v364
    %667 = vmatpush1.msra.mxu0 %v363
    %668 = vmatprep.subr.mxu0 %v360
    %669 = vmatpush1.msra.mxu0 %v359
    %670 = vmatprep.subr.mxu0 %v356
    %671 = vmatpush1.msra.mxu0 %v355
    %672 = vmatprep.subr.mxu0 %v352
    %673 = vmatpush1.msra.mxu0 %v351
    %674 = vmatprep.subr.mxu0 %v348
    %675 = vmatpush1.msra.mxu0 %v347
    %676 = vmatprep.subr.mxu0 %v344
    %677 = vmatpush1.msra.mxu0 %v343
    %678 = vmatprep.subr.mxu0 0.0
    %679 = vmatpush2.msra.mxu0 0.0
    %680 = vmatprep.subr.mxu0 0.0
    %681 = vmatpush2.msra.mxu0 0.0
    %682 = vmatprep.subr.mxu0 0.0
    %683 = vmatpush2.msra.mxu0 0.0
    %684 = vmatprep.subr.mxu0 0.0
    %685 = vmatpush2.msra.mxu0 0.0
    %686 = vmatprep.subr.mxu0 0.0
    %687 = vmatpush2.msra.mxu0 0.0
    %688 = vmatprep.subr.mxu0 0.0
    %689 = vmatpush2.msra.mxu0 0.0
    %690 = vmatprep.subr.mxu0 0.0
    %691 = vmatpush2.msra.mxu0 0.0
    %692 = vmatprep.subr.mxu0 0.0
    %693 = vmatpush2.msra.mxu0 0.0
    %694 = vmatprep.subr.mxu0 0.0
    %695 = vmatpush2.msra.mxu0 0.0
    %696 = vmatprep.subr.mxu0 0.0
    %697 = vmatpush2.msra.mxu0 0.0
    %698 = vmatprep.subr.mxu0 0.0
    %699 = vmatpush2.msra.mxu0 0.0
    %700 = vmatprep.subr.mxu0 0.0
    %701 = vmatpush2.msra.mxu0 0.0
    %702 = vmatprep.subr.mxu0 0.0
    %703 = vmatpush2.msra.mxu0 0.0
    %704 = vmatprep.subr.mxu0 0.0
    %705 = vmatpush2.msra.mxu0 0.0
    %706 = vmatprep.subr.mxu0 0.0
    %707 = vmatpush2.msra.mxu0 0.0
    %708 = vmatprep.subr.mxu0 0.0
    %709 = vmatpush2.msra.mxu0 0.0
    %710 = vmatprep.mubr.f32.mxu0 0.0
    %711 = vmatmul.mubr.f32.gmra.mxu0 %v574
    %v712 = vpop.f32.mrf.mxu0
    %v713 = vadd.f32 0.0, %v712
    %v714 = vpop.f32.mrf.mxu0
    %v715 = vadd.f32 0.0, %v714
    %716 = vdwg.mxu0
    %v717 = vadd.f32 %v188, %v642
    %v718 = vadd.f32 %v190, %v644
    %v719 = vadd.f32 %v301, %v713
    %v720 = vadd.f32 %v303, %v715
    %v721 = vxor.u32 %v717, 2147483648
    %v722 = vmul.f32 %v721, 1.442695
    %v723 = vpow.pop %v722
    %v724 = vadd.f32 %v723, 1.0
    %v725 = vrcp.pop %v724
    %v726 = vmul.f32 1.0, %v725
    %v727 = vxor.u32 %v718, 2147483648
    %v728 = vmul.f32 %v727, 1.442695
    %v729 = vpow.pop %v728
    %v730 = vadd.f32 %v729, 1.0
    %v731 = vrcp.pop %v730
    %v732 = vmul.f32 1.0, %v731
    %v733 = vtanh.pop %v719
    %v734 = vxor.u32 %v720, 2147483648
    %v735 = vmul.f32 %v734, 1.442695
    %v736 = vpow.pop %v735
    %v737 = vadd.f32 %v736, 1.0
    %v738 = vrcp.pop %v737
    %v739 = vmul.f32 1.0, %v738
    %v740 = vmul.f32 %v732, %v572
    %v741 = vmul.f32 %v726, %v733
    %v742 = vadd.f32 %v740, %v741
    %v743 = vtanh.pop %v742
    %v744 = vmul.f32 %v739, %v743
    %745 = vmatprep.subr.mxu0 %v402
    %746 = vmatpush1.msra.mxu0 %v401
    %747 = vmatprep.subr.mxu0 %v398
    %748 = vmatpush1.msra.mxu0 %v397
    %749 = vmatprep.subr.mxu0 %v394
    %750 = vmatpush1.msra.mxu0 %v393
    %751 = vmatprep.subr.mxu0 %v390
    %752 = vmatpush1.msra.mxu0 %v389
    %753 = vmatprep.subr.mxu0 %v386
    %754 = vmatpush1.msra.mxu0 %v385
    %755 = vmatprep.subr.mxu0 %v382
    %756 = vmatpush1.msra.mxu0 %v381
    %757 = vmatprep.subr.mxu0 %v378
    %758 = vmatpush1.msra.mxu0 %v377
    %759 = vmatprep.subr.mxu0 %v374
    %760 = vmatpush1.msra.mxu0 %v373
    %761 = vmatprep.subr.mxu0 %v370
    %762 = vmatpush1.msra.mxu0 %v369
    %763 = vmatprep.subr.mxu0 %v366
    %764 = vmatpush1.msra.mxu0 %v365
    %765 = vmatprep.subr.mxu0 %v362
    %766 = vmatpush1.msra.mxu0 %v361
    %767 = vmatprep.subr.mxu0 %v358
    %768 = vmatpush1.msra.mxu0 %v357
    %769 = vmatprep.subr.mxu0 %v354
    %770 = vmatpush1.msra.mxu0 %v353
    %771 = vmatprep.subr.mxu0 %v350
    %772 = vmatpush1.msra.mxu0 %v349
    %773 = vmatprep.subr.mxu0 %v346
    %774 = vmatpush1.msra.mxu0 %v345
    %775 = vmatprep.subr.mxu0 %v342
    %776 = vmatpush1.msra.mxu0 %v341
    %777 = vmatprep.subr.mxu0 0.0
    %778 = vmatpush2.msra.mxu0 0.0
    %779 = vmatprep.subr.mxu0 0.0
    %780 = vmatpush2.msra.mxu0 0.0
    %781 = vmatprep.subr.mxu0 0.0
    %782 = vmatpush2.msra.mxu0 0.0
    %783 = vmatprep.subr.mxu0 0.0
    %784 = vmatpush2.msra.mxu0 0.0
    %785 = vmatprep.subr.mxu0 0.0
    %786 = vmatpush2.msra.mxu0 0.0
    %787 = vmatprep.subr.mxu0 0.0
    %788 = vmatpush2.msra.mxu0 0.0
    %789 = vmatprep.subr.mxu0 0.0
    %790 = vmatpush2.msra.mxu0 0.0
    %791 = vmatprep.subr.mxu0 0.0
    %792 = vmatpush2.msra.mxu0 0.0
    %793 = vmatprep.subr.mxu0 0.0
    %794 = vmatpush2.msra.mxu0 0.0
    %795 = vmatprep.subr.mxu0 0.0
    %796 = vmatpush2.msra.mxu0 0.0
    %797 = vmatprep.subr.mxu0 0.0
    %798 = vmatpush2.msra.mxu0 0.0
    %799 = vmatprep.subr.mxu0 0.0
    %800 = vmatpush2.msra.mxu0 0.0
    %801 = vmatprep.subr.mxu0 0.0
    %802 = vmatpush2.msra.mxu0 0.0
    %803 = vmatprep.subr.mxu0 0.0
    %804 = vmatpush2.msra.mxu0 0.0
    %805 = vmatprep.subr.mxu0 0.0
    %806 = vmatpush2.msra.mxu0 0.0
    %807 = vmatprep.subr.mxu0 0.0
    %808 = vmatpush2.msra.mxu0 0.0
    %809 = vmatprep.mubr.f32.mxu0 0.0
    %810 = vmatmul.mubr.f32.gmra.mxu0 %v744
    %v811 = vpop.f32.mrf.mxu0
    %v812 = vadd.f32 0.0, %v811
    %v813 = vpop.f32.mrf.mxu0
    %v814 = vadd.f32 0.0, %v813
    %815 = vdwg.mxu0
    %816 = vmatprep.subr.mxu0 %v404
    %817 = vmatpush1.msra.mxu0 %v403
    %818 = vmatprep.subr.mxu0 %v400
    %819 = vmatpush1.msra.mxu0 %v399
    %820 = vmatprep.subr.mxu0 %v396
    %821 = vmatpush1.msra.mxu0 %v395
    %822 = vmatprep.subr.mxu0 %v392
    %823 = vmatpush1.msra.mxu0 %v391
    %824 = vmatprep.subr.mxu0 %v388
    %825 = vmatpush1.msra.mxu0 %v387
    %826 = vmatprep.subr.mxu0 %v384
    %827 = vmatpush1.msra.mxu0 %v383
    %828 = vmatprep.subr.mxu0 %v380
    %829 = vmatpush1.msra.mxu0 %v379
    %830 = vmatprep.subr.mxu0 %v376
    %831 = vmatpush1.msra.mxu0 %v375
    %832 = vmatprep.subr.mxu0 %v372
    %833 = vmatpush1.msra.mxu0 %v371
    %834 = vmatprep.subr.mxu0 %v368
    %835 = vmatpush1.msra.mxu0 %v367
    %836 = vmatprep.subr.mxu0 %v364
    %837 = vmatpush1.msra.mxu0 %v363
    %838 = vmatprep.subr.mxu0 %v360
    %839 = vmatpush1.msra.mxu0 %v359
    %840 = vmatprep.subr.mxu0 %v356
    %841 = vmatpush1.msra.mxu0 %v355
    %842 = vmatprep.subr.mxu0 %v352
    %843 = vmatpush1.msra.mxu0 %v351
    %844 = vmatprep.subr.mxu0 %v348
    %845 = vmatpush1.msra.mxu0 %v347
    %846 = vmatprep.subr.mxu0 %v344
    %847 = vmatpush1.msra.mxu0 %v343
    %848 = vmatprep.subr.mxu0 0.0
    %849 = vmatpush2.msra.mxu0 0.0
    %850 = vmatprep.subr.mxu0 0.0
    %851 = vmatpush2.msra.mxu0 0.0
    %852 = vmatprep.subr.mxu0 0.0
    %853 = vmatpush2.msra.mxu0 0.0
    %854 = vmatprep.subr.mxu0 0.0
    %855 = vmatpush2.msra.mxu0 0.0
    %856 = vmatprep.subr.mxu0 0.0
    %857 = vmatpush2.msra.mxu0 0.0
    %858 = vmatprep.subr.mxu0 0.0
    %859 = vmatpush2.msra.mxu0 0.0
    %860 = vmatprep.subr.mxu0 0.0
    %861 = vmatpush2.msra.mxu0 0.0
    %862 = vmatprep.subr.mxu0 0.0
    %863 = vmatpush2.msra.mxu0 0.0
    %864 = vmatprep.subr.mxu0 0.0
    %865 = vmatpush2.msra.mxu0 0.0
    %866 = vmatprep.subr.mxu0 0.0
    %867 = vmatpush2.msra.mxu0 0.0
    %868 = vmatprep.subr.mxu0 0.0
    %869 = vmatpush2.msra.mxu0 0.0
    %870 = vmatprep.subr.mxu0 0.0
    %871 = vmatpush2.msra.mxu0 0.0
    %872 = vmatprep.subr.mxu0 0.0
    %873 = vmatpush2.msra.mxu0 0.0
    %874 = vmatprep.subr.mxu0 0.0
    %875 = vmatpush2.msra.mxu0 0.0
    %876 = vmatprep.subr.mxu0 0.0
    %877 = vmatpush2.msra.mxu0 0.0
    %878 = vmatprep.subr.mxu0 0.0
    %879 = vmatpush2.msra.mxu0 0.0
    %880 = vmatprep.mubr.f32.mxu0 0.0
    %881 = vmatmul.mubr.f32.gmra.mxu0 %v744
    %v882 = vpop.f32.mrf.mxu0
    %v883 = vadd.f32 0.0, %v882
    %v884 = vpop.f32.mrf.mxu0
    %v885 = vadd.f32 0.0, %v884
    %886 = vdwg.mxu0
    %v887 = vadd.f32 %v194, %v812
    %v888 = vadd.f32 %v196, %v814
    %v889 = vadd.f32 %v307, %v883
    %v890 = vadd.f32 %v309, %v885
    %v891 = vxor.u32 %v887, 2147483648
    %v892 = vmul.f32 %v891, 1.442695
    %v893 = vpow.pop %v892
    %v894 = vadd.f32 %v893, 1.0
    %v895 = vrcp.pop %v894
    %v896 = vmul.f32 1.0, %v895
    %v897 = vxor.u32 %v888, 2147483648
    %v898 = vmul.f32 %v897, 1.442695
    %v899 = vpow.pop %v898
    %v900 = vadd.f32 %v899, 1.0
    %v901 = vrcp.pop %v900
    %v902 = vmul.f32 1.0, %v901
    %v903 = vtanh.pop %v889
    %v904 = vxor.u32 %v890, 2147483648
    %v905 = vmul.f32 %v904, 1.442695
    %v906 = vpow.pop %v905
    %v907 = vadd.f32 %v906, 1.0
    %v908 = vrcp.pop %v907
    %v909 = vmul.f32 1.0, %v908
    %v910 = vmul.f32 %v902, %v742
    %v911 = vmul.f32 %v896, %v903
    %v912 = vadd.f32 %v910, %v911
    %v913 = vtanh.pop %v912
    %v914 = vmul.f32 %v909, %v913
    %915 = vmatprep.subr.mxu0 %v402
    %916 = vmatpush1.msra.mxu0 %v401
    %917 = vmatprep.subr.mxu0 %v398
    %918 = vmatpush1.msra.mxu0 %v397
    %919 = vmatprep.subr.mxu0 %v394
    %920 = vmatpush1.msra.mxu0 %v393
    %921 = vmatprep.subr.mxu0 %v390
    %922 = vmatpush1.msra.mxu0 %v389
    %923 = vmatprep.subr.mxu0 %v386
    %924 = vmatpush1.msra.mxu0 %v385
    %925 = vmatprep.subr.mxu0 %v382
    %926 = vmatpush1.msra.mxu0 %v381
    %927 = vmatprep.subr.mxu0 %v378
    %928 = vmatpush1.msra.mxu0 %v377
    %929 = vmatprep.subr.mxu0 %v374
    %930 = vmatpush1.msra.mxu0 %v373
    %931 = vmatprep.subr.mxu0 %v370
    %932 = vmatpush1.msra.mxu0 %v369
    %933 = vmatprep.subr.mxu0 %v366
    %934 = vmatpush1.msra.mxu0 %v365
    %935 = vmatprep.subr.mxu0 %v362
    %936 = vmatpush1.msra.mxu0 %v361
    %937 = vmatprep.subr.mxu0 %v358
    %938 = vmatpush1.msra.mxu0 %v357
    %939 = vmatprep.subr.mxu0 %v354
    %940 = vmatpush1.msra.mxu0 %v353
    %941 = vmatprep.subr.mxu0 %v350
    %942 = vmatpush1.msra.mxu0 %v349
    %943 = vmatprep.subr.mxu0 %v346
    %944 = vmatpush1.msra.mxu0 %v345
    %945 = vmatprep.subr.mxu0 %v342
    %946 = vmatpush1.msra.mxu0 %v341
    %947 = vmatprep.subr.mxu0 0.0
    %948 = vmatpush2.msra.mxu0 0.0
    %949 = vmatprep.subr.mxu0 0.0
    %950 = vmatpush2.msra.mxu0 0.0
    %951 = vmatprep.subr.mxu0 0.0
    %952 = vmatpush2.msra.mxu0 0.0
    %953 = vmatprep.subr.mxu0 0.0
    %954 = vmatpush2.msra.mxu0 0.0
    %955 = vmatprep.subr.mxu0 0.0
    %956 = vmatpush2.msra.mxu0 0.0
    %957 = vmatprep.subr.mxu0 0.0
    %958 = vmatpush2.msra.mxu0 0.0
    %959 = vmatprep.subr.mxu0 0.0
    %960 = vmatpush2.msra.mxu0 0.0
    %961 = vmatprep.subr.mxu0 0.0
    %962 = vmatpush2.msra.mxu0 0.0
    %963 = vmatprep.subr.mxu0 0.0
    %964 = vmatpush2.msra.mxu0 0.0
    %965 = vmatprep.subr.mxu0 0.0
    %966 = vmatpush2.msra.mxu0 0.0
    %967 = vmatprep.subr.mxu0 0.0
    %968 = vmatpush2.msra.mxu0 0.0
    %969 = vmatprep.subr.mxu0 0.0
    %970 = vmatpush2.msra.mxu0 0.0
    %971 = vmatprep.subr.mxu0 0.0
    %972 = vmatpush2.msra.mxu0 0.0
    %973 = vmatprep.subr.mxu0 0.0
    %974 = vmatpush2.msra.mxu0 0.0
    %975 = vmatprep.subr.mxu0 0.0
    %976 = vmatpush2.msra.mxu0 0.0
    %977 = vmatprep.subr.mxu0 0.0
    %978 = vmatpush2.msra.mxu0 0.0
    %979 = vmatprep.mubr.f32.mxu0 0.0
    %980 = vmatmul.mubr.f32.gmra.mxu0 %v914
    %v981 = vpop.f32.mrf.mxu0
    %v982 = vadd.f32 0.0, %v981
    %v983 = vpop.f32.mrf.mxu0
    %v984 = vadd.f32 0.0, %v983
    %985 = vdwg.mxu0
    %986 = vmatprep.subr.mxu0 %v404
    %987 = vmatpush1.msra.mxu0 %v403
    %988 = vmatprep.subr.mxu0 %v400
    %989 = vmatpush1.msra.mxu0 %v399
    %990 = vmatprep.subr.mxu0 %v396
    %991 = vmatpush1.msra.mxu0 %v395
    %992 = vmatprep.subr.mxu0 %v392
    %993 = vmatpush1.msra.mxu0 %v391
    %994 = vmatprep.subr.mxu0 %v388
    %995 = vmatpush1.msra.mxu0 %v387
    %996 = vmatprep.subr.mxu0 %v384
    %997 = vmatpush1.msra.mxu0 %v383
    %998 = vmatprep.subr.mxu0 %v380
    %999 = vmatpush1.msra.mxu0 %v379
    %1000 = vmatprep.subr.mxu0 %v376
    %1001 = vmatpush1.msra.mxu0 %v375
    %1002 = vmatprep.subr.mxu0 %v372
    %1003 = vmatpush1.msra.mxu0 %v371
    %1004 = vmatprep.subr.mxu0 %v368
    %1005 = vmatpush1.msra.mxu0 %v367
    %1006 = vmatprep.subr.mxu0 %v364
    %1007 = vmatpush1.msra.mxu0 %v363
    %1008 = vmatprep.subr.mxu0 %v360
    %1009 = vmatpush1.msra.mxu0 %v359
    %1010 = vmatprep.subr.mxu0 %v356
    %1011 = vmatpush1.msra.mxu0 %v355
    %1012 = vmatprep.subr.mxu0 %v352
    %1013 = vmatpush1.msra.mxu0 %v351
    %1014 = vmatprep.subr.mxu0 %v348
    %1015 = vmatpush1.msra.mxu0 %v347
    %1016 = vmatprep.subr.mxu0 %v344
    %1017 = vmatpush1.msra.mxu0 %v343
    %1018 = vmatprep.subr.mxu0 0.0
    %1019 = vmatpush2.msra.mxu0 0.0
    %1020 = vmatprep.subr.mxu0 0.0
    %1021 = vmatpush2.msra.mxu0 0.0
    %1022 = vmatprep.subr.mxu0 0.0
    %1023 = vmatpush2.msra.mxu0 0.0
    %1024 = vmatprep.subr.mxu0 0.0
    %1025 = vmatpush2.msra.mxu0 0.0
    %1026 = vmatprep.subr.mxu0 0.0
    %1027 = vmatpush2.msra.mxu0 0.0
    %1028 = vmatprep.subr.mxu0 0.0
    %1029 = vmatpush2.msra.mxu0 0.0
    %1030 = vmatprep.subr.mxu0 0.0
    %1031 = vmatpush2.msra.mxu0 0.0
    %1032 = vmatprep.subr.mxu0 0.0
    %1033 = vmatpush2.msra.mxu0 0.0
    %1034 = vmatprep.subr.mxu0 0.0
    %1035 = vmatpush2.msra.mxu0 0.0
    %1036 = vmatprep.subr.mxu0 0.0
    %1037 = vmatpush2.msra.mxu0 0.0
    %1038 = vmatprep.subr.mxu0 0.0
    %1039 = vmatpush2.msra.mxu0 0.0
    %1040 = vmatprep.subr.mxu0 0.0
    %1041 = vmatpush2.msra.mxu0 0.0
    %1042 = vmatprep.subr.mxu0 0.0
    %1043 = vmatpush2.msra.mxu0 0.0
    %1044 = vmatprep.subr.mxu0 0.0
    %1045 = vmatpush2.msra.mxu0 0.0
    %1046 = vmatprep.subr.mxu0 0.0
    %1047 = vmatpush2.msra.mxu0 0.0
    %1048 = vmatprep.subr.mxu0 0.0
    %1049 = vmatpush2.msra.mxu0 0.0
    %1050 = vmatprep.mubr.f32.mxu0 0.0
    %1051 = vmatmul.mubr.f32.gmra.mxu0 %v914
    %v1052 = vpop.f32.mrf.mxu0
    %v1053 = vadd.f32 0.0, %v1052
    %v1054 = vpop.f32.mrf.mxu0
    %v1055 = vadd.f32 0.0, %v1054
    %1056 = vdwg.mxu0
    %v1057 = vadd.f32 %v200, %v982
    %v1058 = vadd.f32 %v202, %v984
    %v1059 = vadd.f32 %v313, %v1053
    %v1060 = vadd.f32 %v315, %v1055
    %v1061 = vxor.u32 %v1057, 2147483648
    %v1062 = vmul.f32 %v1061, 1.442695
    %v1063 = vpow.pop %v1062
    %v1064 = vadd.f32 %v1063, 1.0
    %v1065 = vrcp.pop %v1064
    %v1066 = vmul.f32 1.0, %v1065
    %v1067 = vxor.u32 %v1058, 2147483648
    %v1068 = vmul.f32 %v1067, 1.442695
    %v1069 = vpow.pop %v1068
    %v1070 = vadd.f32 %v1069, 1.0
    %v1071 = vrcp.pop %v1070
    %v1072 = vmul.f32 1.0, %v1071
    %v1073 = vtanh.pop %v1059
    %v1074 = vxor.u32 %v1060, 2147483648
    %v1075 = vmul.f32 %v1074, 1.442695
    %v1076 = vpow.pop %v1075
    %v1077 = vadd.f32 %v1076, 1.0
    %v1078 = vrcp.pop %v1077
    %v1079 = vmul.f32 1.0, %v1078
    %v1080 = vmul.f32 %v1072, %v912
    %v1081 = vmul.f32 %v1066, %v1073
    %v1082 = vadd.f32 %v1080, %v1081
    %v1083 = vtanh.pop %v1082
    %v1084 = vmul.f32 %v1079, %v1083
    %1085 = vmatprep.subr.mxu0 %v402
    %1086 = vmatpush1.msra.mxu0 %v401
    %1087 = vmatprep.subr.mxu0 %v398
    %1088 = vmatpush1.msra.mxu0 %v397
    %1089 = vmatprep.subr.mxu0 %v394
    %1090 = vmatpush1.msra.mxu0 %v393
    %1091 = vmatprep.subr.mxu0 %v390
    %1092 = vmatpush1.msra.mxu0 %v389
    %1093 = vmatprep.subr.mxu0 %v386
    %1094 = vmatpush1.msra.mxu0 %v385
    %1095 = vmatprep.subr.mxu0 %v382
    %1096 = vmatpush1.msra.mxu0 %v381
    %1097 = vmatprep.subr.mxu0 %v378
    %1098 = vmatpush1.msra.mxu0 %v377
    %1099 = vmatprep.subr.mxu0 %v374
    %1100 = vmatpush1.msra.mxu0 %v373
    %1101 = vmatprep.subr.mxu0 %v370
    %1102 = vmatpush1.msra.mxu0 %v369
    %1103 = vmatprep.subr.mxu0 %v366
    %1104 = vmatpush1.msra.mxu0 %v365
    %1105 = vmatprep.subr.mxu0 %v362
    %1106 = vmatpush1.msra.mxu0 %v361
    %1107 = vmatprep.subr.mxu0 %v358
    %1108 = vmatpush1.msra.mxu0 %v357
    %1109 = vmatprep.subr.mxu0 %v354
    %1110 = vmatpush1.msra.mxu0 %v353
    %1111 = vmatprep.subr.mxu0 %v350
    %1112 = vmatpush1.msra.mxu0 %v349
    %1113 = vmatprep.subr.mxu0 %v346
    %1114 = vmatpush1.msra.mxu0 %v345
    %1115 = vmatprep.subr.mxu0 %v342
    %1116 = vmatpush1.msra.mxu0 %v341
    %1117 = vmatprep.subr.mxu0 0.0
    %1118 = vmatpush2.msra.mxu0 0.0
    %1119 = vmatprep.subr.mxu0 0.0
    %1120 = vmatpush2.msra.mxu0 0.0
    %1121 = vmatprep.subr.mxu0 0.0
    %1122 = vmatpush2.msra.mxu0 0.0
    %1123 = vmatprep.subr.mxu0 0.0
    %1124 = vmatpush2.msra.mxu0 0.0
    %1125 = vmatprep.subr.mxu0 0.0
    %1126 = vmatpush2.msra.mxu0 0.0
    %1127 = vmatprep.subr.mxu0 0.0
    %1128 = vmatpush2.msra.mxu0 0.0
    %1129 = vmatprep.subr.mxu0 0.0
    %1130 = vmatpush2.msra.mxu0 0.0
    %1131 = vmatprep.subr.mxu0 0.0
    %1132 = vmatpush2.msra.mxu0 0.0
    %1133 = vmatprep.subr.mxu0 0.0
    %1134 = vmatpush2.msra.mxu0 0.0
    %1135 = vmatprep.subr.mxu0 0.0
    %1136 = vmatpush2.msra.mxu0 0.0
    %1137 = vmatprep.subr.mxu0 0.0
    %1138 = vmatpush2.msra.mxu0 0.0
    %1139 = vmatprep.subr.mxu0 0.0
    %1140 = vmatpush2.msra.mxu0 0.0
    %1141 = vmatprep.subr.mxu0 0.0
    %1142 = vmatpush2.msra.mxu0 0.0
    %1143 = vmatprep.subr.mxu0 0.0
    %1144 = vmatpush2.msra.mxu0 0.0
    %1145 = vmatprep.subr.mxu0 0.0
    %1146 = vmatpush2.msra.mxu0 0.0
    %1147 = vmatprep.subr.mxu0 0.0
    %1148 = vmatpush2.msra.mxu0 0.0
    %1149 = vmatprep.mubr.f32.mxu0 0.0
    %1150 = vmatmul.mubr.f32.gmra.mxu0 %v1084
    %v1151 = vpop.f32.mrf.mxu0
    %v1152 = vadd.f32 0.0, %v1151
    %v1153 = vpop.f32.mrf.mxu0
    %v1154 = vadd.f32 0.0, %v1153
    %1155 = vdwg.mxu0
    %1156 = vmatprep.subr.mxu0 %v404
    %1157 = vmatpush1.msra.mxu0 %v403
    %1158 = vmatprep.subr.mxu0 %v400
    %1159 = vmatpush1.msra.mxu0 %v399
    %1160 = vmatprep.subr.mxu0 %v396
    %1161 = vmatpush1.msra.mxu0 %v395
    %1162 = vmatprep.subr.mxu0 %v392
    %1163 = vmatpush1.msra.mxu0 %v391
    %1164 = vmatprep.subr.mxu0 %v388
    %1165 = vmatpush1.msra.mxu0 %v387
    %1166 = vmatprep.subr.mxu0 %v384
    %1167 = vmatpush1.msra.mxu0 %v383
    %1168 = vmatprep.subr.mxu0 %v380
    %1169 = vmatpush1.msra.mxu0 %v379
    %1170 = vmatprep.subr.mxu0 %v376
    %1171 = vmatpush1.msra.mxu0 %v375
    %1172 = vmatprep.subr.mxu0 %v372
    %1173 = vmatpush1.msra.mxu0 %v371
    %1174 = vmatprep.subr.mxu0 %v368
    %1175 = vmatpush1.msra.mxu0 %v367
    %1176 = vmatprep.subr.mxu0 %v364
    %1177 = vmatpush1.msra.mxu0 %v363
    %1178 = vmatprep.subr.mxu0 %v360
    %1179 = vmatpush1.msra.mxu0 %v359
    %1180 = vmatprep.subr.mxu0 %v356
    %1181 = vmatpush1.msra.mxu0 %v355
    %1182 = vmatprep.subr.mxu0 %v352
    %1183 = vmatpush1.msra.mxu0 %v351
    %1184 = vmatprep.subr.mxu0 %v348
    %1185 = vmatpush1.msra.mxu0 %v347
    %1186 = vmatprep.subr.mxu0 %v344
    %1187 = vmatpush1.msra.mxu0 %v343
    %1188 = vmatprep.subr.mxu0 0.0
    %1189 = vmatpush2.msra.mxu0 0.0
    %1190 = vmatprep.subr.mxu0 0.0
    %1191 = vmatpush2.msra.mxu0 0.0
    %1192 = vmatprep.subr.mxu0 0.0
    %1193 = vmatpush2.msra.mxu0 0.0
    %1194 = vmatprep.subr.mxu0 0.0
    %1195 = vmatpush2.msra.mxu0 0.0
    %1196 = vmatprep.subr.mxu0 0.0
    %1197 = vmatpush2.msra.mxu0 0.0
    %1198 = vmatprep.subr.mxu0 0.0
    %1199 = vmatpush2.msra.mxu0 0.0
    %1200 = vmatprep.subr.mxu0 0.0
    %1201 = vmatpush2.msra.mxu0 0.0
    %1202 = vmatprep.subr.mxu0 0.0
    %1203 = vmatpush2.msra.mxu0 0.0
    %1204 = vmatprep.subr.mxu0 0.0
    %1205 = vmatpush2.msra.mxu0 0.0
    %1206 = vmatprep.subr.mxu0 0.0
    %1207 = vmatpush2.msra.mxu0 0.0
    %1208 = vmatprep.subr.mxu0 0.0
    %1209 = vmatpush2.msra.mxu0 0.0
    %1210 = vmatprep.subr.mxu0 0.0
    %1211 = vmatpush2.msra.mxu0 0.0
    %1212 = vmatprep.subr.mxu0 0.0
    %1213 = vmatpush2.msra.mxu0 0.0
    %1214 = vmatprep.subr.mxu0 0.0
    %1215 = vmatpush2.msra.mxu0 0.0
    %1216 = vmatprep.subr.mxu0 0.0
    %1217 = vmatpush2.msra.mxu0 0.0
    %1218 = vmatprep.subr.mxu0 0.0
    %1219 = vmatpush2.msra.mxu0 0.0
    %1220 = vmatprep.mubr.f32.mxu0 0.0
    %1221 = vmatmul.mubr.f32.gmra.mxu0 %v1084
    %v1222 = vpop.f32.mrf.mxu0
    %v1223 = vadd.f32 0.0, %v1222
    %v1224 = vpop.f32.mrf.mxu0
    %v1225 = vadd.f32 0.0, %v1224
    %1226 = vdwg.mxu0
    %v1227 = vadd.f32 %v206, %v1152
    %v1228 = vadd.f32 %v208, %v1154
    %v1229 = vadd.f32 %v319, %v1223
    %v1230 = vadd.f32 %v321, %v1225
    %v1231 = vxor.u32 %v1227, 2147483648
    %v1232 = vmul.f32 %v1231, 1.442695
    %v1233 = vpow.pop %v1232
    %v1234 = vadd.f32 %v1233, 1.0
    %v1235 = vrcp.pop %v1234
    %v1236 = vmul.f32 1.0, %v1235
    %v1237 = vxor.u32 %v1228, 2147483648
    %v1238 = vmul.f32 %v1237, 1.442695
    %v1239 = vpow.pop %v1238
    %v1240 = vadd.f32 %v1239, 1.0
    %v1241 = vrcp.pop %v1240
    %v1242 = vmul.f32 1.0, %v1241
    %v1243 = vtanh.pop %v1229
    %v1244 = vxor.u32 %v1230, 2147483648
    %v1245 = vmul.f32 %v1244, 1.442695
    %v1246 = vpow.pop %v1245
    %v1247 = vadd.f32 %v1246, 1.0
    %v1248 = vrcp.pop %v1247
    %v1249 = vmul.f32 1.0, %v1248
    %v1250 = vmul.f32 %v1242, %v1082
    %v1251 = vmul.f32 %v1236, %v1243
    %v1252 = vadd.f32 %v1250, %v1251
    %v1253 = vtanh.pop %v1252
    %v1254 = vmul.f32 %v1249, %v1253
    %1255 = vmatprep.subr.mxu0 %v402
    %1256 = vmatpush1.msra.mxu0 %v401
    %1257 = vmatprep.subr.mxu0 %v398
    %1258 = vmatpush1.msra.mxu0 %v397
    %1259 = vmatprep.subr.mxu0 %v394
    %1260 = vmatpush1.msra.mxu0 %v393
    %1261 = vmatprep.subr.mxu0 %v390
    %1262 = vmatpush1.msra.mxu0 %v389
    %1263 = vmatprep.subr.mxu0 %v386
    %1264 = vmatpush1.msra.mxu0 %v385
    %1265 = vmatprep.subr.mxu0 %v382
    %1266 = vmatpush1.msra.mxu0 %v381
    %1267 = vmatprep.subr.mxu0 %v378
    %1268 = vmatpush1.msra.mxu0 %v377
    %1269 = vmatprep.subr.mxu0 %v374
    %1270 = vmatpush1.msra.mxu0 %v373
    %1271 = vmatprep.subr.mxu0 %v370
    %1272 = vmatpush1.msra.mxu0 %v369
    %1273 = vmatprep.subr.mxu0 %v366
    %1274 = vmatpush1.msra.mxu0 %v365
    %1275 = vmatprep.subr.mxu0 %v362
    %1276 = vmatpush1.msra.mxu0 %v361
    %1277 = vmatprep.subr.mxu0 %v358
    %1278 = vmatpush1.msra.mxu0 %v357
    %1279 = vmatprep.subr.mxu0 %v354
    %1280 = vmatpush1.msra.mxu0 %v353
    %1281 = vmatprep.subr.mxu0 %v350
    %1282 = vmatpush1.msra.mxu0 %v349
    %1283 = vmatprep.subr.mxu0 %v346
    %1284 = vmatpush1.msra.mxu0 %v345
    %1285 = vmatprep.subr.mxu0 %v342
    %1286 = vmatpush1.msra.mxu0 %v341
    %1287 = vmatprep.subr.mxu0 0.0
    %1288 = vmatpush2.msra.mxu0 0.0
    %1289 = vmatprep.subr.mxu0 0.0
    %1290 = vmatpush2.msra.mxu0 0.0
    %1291 = vmatprep.subr.mxu0 0.0
    %1292 = vmatpush2.msra.mxu0 0.0
    %1293 = vmatprep.subr.mxu0 0.0
    %1294 = vmatpush2.msra.mxu0 0.0
    %1295 = vmatprep.subr.mxu0 0.0
    %1296 = vmatpush2.msra.mxu0 0.0
    %1297 = vmatprep.subr.mxu0 0.0
    %1298 = vmatpush2.msra.mxu0 0.0
    %1299 = vmatprep.subr.mxu0 0.0
    %1300 = vmatpush2.msra.mxu0 0.0
    %1301 = vmatprep.subr.mxu0 0.0
    %1302 = vmatpush2.msra.mxu0 0.0
    %1303 = vmatprep.subr.mxu0 0.0
    %1304 = vmatpush2.msra.mxu0 0.0
    %1305 = vmatprep.subr.mxu0 0.0
    %1306 = vmatpush2.msra.mxu0 0.0
    %1307 = vmatprep.subr.mxu0 0.0
    %1308 = vmatpush2.msra.mxu0 0.0
    %1309 = vmatprep.subr.mxu0 0.0
    %1310 = vmatpush2.msra.mxu0 0.0
    %1311 = vmatprep.subr.mxu0 0.0
    %1312 = vmatpush2.msra.mxu0 0.0
    %1313 = vmatprep.subr.mxu0 0.0
    %1314 = vmatpush2.msra.mxu0 0.0
    %1315 = vmatprep.subr.mxu0 0.0
    %1316 = vmatpush2.msra.mxu0 0.0
    %1317 = vmatprep.subr.mxu0 0.0
    %1318 = vmatpush2.msra.mxu0 0.0
    %1319 = vmatprep.mubr.f32.mxu0 0.0
    %1320 = vmatmul.mubr.f32.gmra.mxu0 %v1254
    %v1321 = vpop.f32.mrf.mxu0
    %v1322 = vadd.f32 0.0, %v1321
    %v1323 = vpop.f32.mrf.mxu0
    %v1324 = vadd.f32 0.0, %v1323
    %1325 = vdwg.mxu0
    %1326 = vmatprep.subr.mxu0 %v404
    %1327 = vmatpush1.msra.mxu0 %v403
    %1328 = vmatprep.subr.mxu0 %v400
    %1329 = vmatpush1.msra.mxu0 %v399
    %1330 = vmatprep.subr.mxu0 %v396
    %1331 = vmatpush1.msra.mxu0 %v395
    %1332 = vmatprep.subr.mxu0 %v392
    %1333 = vmatpush1.msra.mxu0 %v391
    %1334 = vmatprep.subr.mxu0 %v388
    %1335 = vmatpush1.msra.mxu0 %v387
    %1336 = vmatprep.subr.mxu0 %v384
    %1337 = vmatpush1.msra.mxu0 %v383
    %1338 = vmatprep.subr.mxu0 %v380
    %1339 = vmatpush1.msra.mxu0 %v379
    %1340 = vmatprep.subr.mxu0 %v376
    %1341 = vmatpush1.msra.mxu0 %v375
    %1342 = vmatprep.subr.mxu0 %v372
    %1343 = vmatpush1.msra.mxu0 %v371
    %1344 = vmatprep.subr.mxu0 %v368
    %1345 = vmatpush1.msra.mxu0 %v367
    %1346 = vmatprep.subr.mxu0 %v364
    %1347 = vmatpush1.msra.mxu0 %v363
    %1348 = vmatprep.subr.mxu0 %v360
    %1349 = vmatpush1.msra.mxu0 %v359
    %1350 = vmatprep.subr.mxu0 %v356
    %1351 = vmatpush1.msra.mxu0 %v355
    %1352 = vmatprep.subr.mxu0 %v352
    %1353 = vmatpush1.msra.mxu0 %v351
    %1354 = vmatprep.subr.mxu0 %v348
    %1355 = vmatpush1.msra.mxu0 %v347
    %1356 = vmatprep.subr.mxu0 %v344
    %1357 = vmatpush1.msra.mxu0 %v343
    %1358 = vmatprep.subr.mxu0 0.0
    %1359 = vmatpush2.msra.mxu0 0.0
    %1360 = vmatprep.subr.mxu0 0.0
    %1361 = vmatpush2.msra.mxu0 0.0
    %1362 = vmatprep.subr.mxu0 0.0
    %1363 = vmatpush2.msra.mxu0 0.0
    %1364 = vmatprep.subr.mxu0 0.0
    %1365 = vmatpush2.msra.mxu0 0.0
    %1366 = vmatprep.subr.mxu0 0.0
    %1367 = vmatpush2.msra.mxu0 0.0
    %1368 = vmatprep.subr.mxu0 0.0
    %1369 = vmatpush2.msra.mxu0 0.0
    %1370 = vmatprep.subr.mxu0 0.0
    %1371 = vmatpush2.msra.mxu0 0.0
    %1372 = vmatprep.subr.mxu0 0.0
    %1373 = vmatpush2.msra.mxu0 0.0
    %1374 = vmatprep.subr.mxu0 0.0
    %1375 = vmatpush2.msra.mxu0 0.0
    %1376 = vmatprep.subr.mxu0 0.0
    %1377 = vmatpush2.msra.mxu0 0.0
    %1378 = vmatprep.subr.mxu0 0.0
    %1379 = vmatpush2.msra.mxu0 0.0
    %1380 = vmatprep.subr.mxu0 0.0
    %1381 = vmatpush2.msra.mxu0 0.0
    %1382 = vmatprep.subr.mxu0 0.0
    %1383 = vmatpush2.msra.mxu0 0.0
    %1384 = vmatprep.subr.mxu0 0.0
    %1385 = vmatpush2.msra.mxu0 0.0
    %1386 = vmatprep.subr.mxu0 0.0
    %1387 = vmatpush2.msra.mxu0 0.0
    %1388 = vmatprep.subr.mxu0 0.0
    %1389 = vmatpush2.msra.mxu0 0.0
    %1390 = vmatprep.mubr.f32.mxu0 0.0
    %1391 = vmatmul.mubr.f32.gmra.mxu0 %v1254
    %v1392 = vpop.f32.mrf.mxu0
    %v1393 = vadd.f32 0.0, %v1392
    %v1394 = vpop.f32.mrf.mxu0
    %v1395 = vadd.f32 0.0, %v1394
    %1396 = vdwg.mxu0
    %v1397 = vadd.f32 %v212, %v1322
    %v1398 = vadd.f32 %v214, %v1324
    %v1399 = vadd.f32 %v325, %v1393
    %v1400 = vadd.f32 %v327, %v1395
    %v1401 = vxor.u32 %v1397, 2147483648
    %v1402 = vmul.f32 %v1401, 1.442695
    %v1403 = vpow.pop %v1402
    %v1404 = vadd.f32 %v1403, 1.0
    %v1405 = vrcp.pop %v1404
    %v1406 = vmul.f32 1.0, %v1405
    %v1407 = vxor.u32 %v1398, 2147483648
    %v1408 = vmul.f32 %v1407, 1.442695
    %v1409 = vpow.pop %v1408
    %v1410 = vadd.f32 %v1409, 1.0
    %v1411 = vrcp.pop %v1410
    %v1412 = vmul.f32 1.0, %v1411
    %v1413 = vtanh.pop %v1399
    %v1414 = vxor.u32 %v1400, 2147483648
    %v1415 = vmul.f32 %v1414, 1.442695
    %v1416 = vpow.pop %v1415
    %v1417 = vadd.f32 %v1416, 1.0
    %v1418 = vrcp.pop %v1417
    %v1419 = vmul.f32 1.0, %v1418
    %v1420 = vmul.f32 %v1412, %v1252
    %v1421 = vmul.f32 %v1406, %v1413
    %v1422 = vadd.f32 %v1420, %v1421
    %v1423 = vtanh.pop %v1422
    %v1424 = vmul.f32 %v1419, %v1423
    %1425 = vmatprep.subr.mxu0 %v402
    %1426 = vmatpush1.msra.mxu0 %v401
    %1427 = vmatprep.subr.mxu0 %v398
    %1428 = vmatpush1.msra.mxu0 %v397
    %1429 = vmatprep.subr.mxu0 %v394
    %1430 = vmatpush1.msra.mxu0 %v393
    %1431 = vmatprep.subr.mxu0 %v390
    %1432 = vmatpush1.msra.mxu0 %v389
    %1433 = vmatprep.subr.mxu0 %v386
    %1434 = vmatpush1.msra.mxu0 %v385
    %1435 = vmatprep.subr.mxu0 %v382
    %1436 = vmatpush1.msra.mxu0 %v381
    %1437 = vmatprep.subr.mxu0 %v378
    %1438 = vmatpush1.msra.mxu0 %v377
    %1439 = vmatprep.subr.mxu0 %v374
    %1440 = vmatpush1.msra.mxu0 %v373
    %1441 = vmatprep.subr.mxu0 %v370
    %1442 = vmatpush1.msra.mxu0 %v369
    %1443 = vmatprep.subr.mxu0 %v366
    %1444 = vmatpush1.msra.mxu0 %v365
    %1445 = vmatprep.subr.mxu0 %v362
    %1446 = vmatpush1.msra.mxu0 %v361
    %1447 = vmatprep.subr.mxu0 %v358
    %1448 = vmatpush1.msra.mxu0 %v357
    %1449 = vmatprep.subr.mxu0 %v354
    %1450 = vmatpush1.msra.mxu0 %v353
    %1451 = vmatprep.subr.mxu0 %v350
    %1452 = vmatpush1.msra.mxu0 %v349
    %1453 = vmatprep.subr.mxu0 %v346
    %1454 = vmatpush1.msra.mxu0 %v345
    %1455 = vmatprep.subr.mxu0 %v342
    %1456 = vmatpush1.msra.mxu0 %v341
    %1457 = vmatprep.subr.mxu0 0.0
    %1458 = vmatpush2.msra.mxu0 0.0
    %1459 = vmatprep.subr.mxu0 0.0
    %1460 = vmatpush2.msra.mxu0 0.0
    %1461 = vmatprep.subr.mxu0 0.0
    %1462 = vmatpush2.msra.mxu0 0.0
    %1463 = vmatprep.subr.mxu0 0.0
    %1464 = vmatpush2.msra.mxu0 0.0
    %1465 = vmatprep.subr.mxu0 0.0
    %1466 = vmatpush2.msra.mxu0 0.0
    %1467 = vmatprep.subr.mxu0 0.0
    %1468 = vmatpush2.msra.mxu0 0.0
    %1469 = vmatprep.subr.mxu0 0.0
    %1470 = vmatpush2.msra.mxu0 0.0
    %1471 = vmatprep.subr.mxu0 0.0
    %1472 = vmatpush2.msra.mxu0 0.0
    %1473 = vmatprep.subr.mxu0 0.0
    %1474 = vmatpush2.msra.mxu0 0.0
    %1475 = vmatprep.subr.mxu0 0.0
    %1476 = vmatpush2.msra.mxu0 0.0
    %1477 = vmatprep.subr.mxu0 0.0
    %1478 = vmatpush2.msra.mxu0 0.0
    %1479 = vmatprep.subr.mxu0 0.0
    %1480 = vmatpush2.msra.mxu0 0.0
    %1481 = vmatprep.subr.mxu0 0.0
    %1482 = vmatpush2.msra.mxu0 0.0
    %1483 = vmatprep.subr.mxu0 0.0
    %1484 = vmatpush2.msra.mxu0 0.0
    %1485 = vmatprep.subr.mxu0 0.0
    %1486 = vmatpush2.msra.mxu0 0.0
    %1487 = vmatprep.subr.mxu0 0.0
    %1488 = vmatpush2.msra.mxu0 0.0
    %1489 = vmatprep.mubr.f32.mxu0 0.0
    %1490 = vmatmul.mubr.f32.gmra.mxu0 %v1424
    %v1491 = vpop.f32.mrf.mxu0
    %v1492 = vadd.f32 0.0, %v1491
    %v1493 = vpop.f32.mrf.mxu0
    %v1494 = vadd.f32 0.0, %v1493
    %1495 = vdwg.mxu0
    %1496 = vmatprep.subr.mxu0 %v404
    %1497 = vmatpush1.msra.mxu0 %v403
    %1498 = vmatprep.subr.mxu0 %v400
    %1499 = vmatpush1.msra.mxu0 %v399
    %1500 = vmatprep.subr.mxu0 %v396
    %1501 = vmatpush1.msra.mxu0 %v395
    %1502 = vmatprep.subr.mxu0 %v392
    %1503 = vmatpush1.msra.mxu0 %v391
    %1504 = vmatprep.subr.mxu0 %v388
    %1505 = vmatpush1.msra.mxu0 %v387
    %1506 = vmatprep.subr.mxu0 %v384
    %1507 = vmatpush1.msra.mxu0 %v383
    %1508 = vmatprep.subr.mxu0 %v380
    %1509 = vmatpush1.msra.mxu0 %v379
    %1510 = vmatprep.subr.mxu0 %v376
    %1511 = vmatpush1.msra.mxu0 %v375
    %1512 = vmatprep.subr.mxu0 %v372
    %1513 = vmatpush1.msra.mxu0 %v371
    %1514 = vmatprep.subr.mxu0 %v368
    %1515 = vmatpush1.msra.mxu0 %v367
    %1516 = vmatprep.subr.mxu0 %v364
    %1517 = vmatpush1.msra.mxu0 %v363
    %1518 = vmatprep.subr.mxu0 %v360
    %1519 = vmatpush1.msra.mxu0 %v359
    %1520 = vmatprep.subr.mxu0 %v356
    %1521 = vmatpush1.msra.mxu0 %v355
    %1522 = vmatprep.subr.mxu0 %v352
    %1523 = vmatpush1.msra.mxu0 %v351
    %1524 = vmatprep.subr.mxu0 %v348
    %1525 = vmatpush1.msra.mxu0 %v347
    %1526 = vmatprep.subr.mxu0 %v344
    %1527 = vmatpush1.msra.mxu0 %v343
    %1528 = vmatprep.subr.mxu0 0.0
    %1529 = vmatpush2.msra.mxu0 0.0
    %1530 = vmatprep.subr.mxu0 0.0
    %1531 = vmatpush2.msra.mxu0 0.0
    %1532 = vmatprep.subr.mxu0 0.0
    %1533 = vmatpush2.msra.mxu0 0.0
    %1534 = vmatprep.subr.mxu0 0.0
    %1535 = vmatpush2.msra.mxu0 0.0
    %1536 = vmatprep.subr.mxu0 0.0
    %1537 = vmatpush2.msra.mxu0 0.0
    %1538 = vmatprep.subr.mxu0 0.0
    %1539 = vmatpush2.msra.mxu0 0.0
    %1540 = vmatprep.subr.mxu0 0.0
    %1541 = vmatpush2.msra.mxu0 0.0
    %1542 = vmatprep.subr.mxu0 0.0
    %1543 = vmatpush2.msra.mxu0 0.0
    %1544 = vmatprep.subr.mxu0 0.0
    %1545 = vmatpush2.msra.mxu0 0.0
    %1546 = vmatprep.subr.mxu0 0.0
    %1547 = vmatpush2.msra.mxu0 0.0
    %1548 = vmatprep.subr.mxu0 0.0
    %1549 = vmatpush2.msra.mxu0 0.0
    %1550 = vmatprep.subr.mxu0 0.0
    %1551 = vmatpush2.msra.mxu0 0.0
    %1552 = vmatprep.subr.mxu0 0.0
    %1553 = vmatpush2.msra.mxu0 0.0
    %1554 = vmatprep.subr.mxu0 0.0
    %1555 = vmatpush2.msra.mxu0 0.0
    %1556 = vmatprep.subr.mxu0 0.0
    %1557 = vmatpush2.msra.mxu0 0.0
    %1558 = vmatprep.subr.mxu0 0.0
    %1559 = vmatpush2.msra.mxu0 0.0
    %1560 = vmatprep.mubr.f32.mxu0 0.0
    %1561 = vmatmul.mubr.f32.gmra.mxu0 %v1424
    %v1562 = vpop.f32.mrf.mxu0
    %v1563 = vadd.f32 0.0, %v1562
    %v1564 = vpop.f32.mrf.mxu0
    %v1565 = vadd.f32 0.0, %v1564
    %1566 = vdwg.mxu0
    %v1567 = vadd.f32 %v218, %v1492
    %v1568 = vadd.f32 %v220, %v1494
    %v1569 = vadd.f32 %v331, %v1563
    %v1570 = vadd.f32 %v333, %v1565
    %v1571 = vxor.u32 %v1567, 2147483648
    %v1572 = vmul.f32 %v1571, 1.442695
    %v1573 = vpow.pop %v1572
    %v1574 = vadd.f32 %v1573, 1.0
    %v1575 = vrcp.pop %v1574
    %v1576 = vmul.f32 1.0, %v1575
    %v1577 = vxor.u32 %v1568, 2147483648
    %v1578 = vmul.f32 %v1577, 1.442695
    %v1579 = vpow.pop %v1578
    %v1580 = vadd.f32 %v1579, 1.0
    %v1581 = vrcp.pop %v1580
    %v1582 = vmul.f32 1.0, %v1581
    %v1583 = vtanh.pop %v1569
    %v1584 = vxor.u32 %v1570, 2147483648
    %v1585 = vmul.f32 %v1584, 1.442695
    %v1586 = vpow.pop %v1585
    %v1587 = vadd.f32 %v1586, 1.0
    %v1588 = vrcp.pop %v1587
    %v1589 = vmul.f32 1.0, %v1588
    %v1590 = vmul.f32 %v1582, %v1422
    %v1591 = vmul.f32 %v1576, %v1583
    %v1592 = vadd.f32 %v1590, %v1591
    %v1593 = vtanh.pop %v1592
    %v1594 = vmul.f32 %v1589, %v1593
    %1595 = vmatprep.subr.mxu0 %v402
    %1596 = vmatpush1.msra.mxu0 %v401
    %1597 = vmatprep.subr.mxu0 %v398
    %1598 = vmatpush1.msra.mxu0 %v397
    %1599 = vmatprep.subr.mxu0 %v394
    %1600 = vmatpush1.msra.mxu0 %v393
    %1601 = vmatprep.subr.mxu0 %v390
    %1602 = vmatpush1.msra.mxu0 %v389
    %1603 = vmatprep.subr.mxu0 %v386
    %1604 = vmatpush1.msra.mxu0 %v385
    %1605 = vmatprep.subr.mxu0 %v382
    %1606 = vmatpush1.msra.mxu0 %v381
    %1607 = vmatprep.subr.mxu0 %v378
    %1608 = vmatpush1.msra.mxu0 %v377
    %1609 = vmatprep.subr.mxu0 %v374
    %1610 = vmatpush1.msra.mxu0 %v373
    %1611 = vmatprep.subr.mxu0 %v370
    %1612 = vmatpush1.msra.mxu0 %v369
    %1613 = vmatprep.subr.mxu0 %v366
    %1614 = vmatpush1.msra.mxu0 %v365
    %1615 = vmatprep.subr.mxu0 %v362
    %1616 = vmatpush1.msra.mxu0 %v361
    %1617 = vmatprep.subr.mxu0 %v358
    %1618 = vmatpush1.msra.mxu0 %v357
    %1619 = vmatprep.subr.mxu0 %v354
    %1620 = vmatpush1.msra.mxu0 %v353
    %1621 = vmatprep.subr.mxu0 %v350
    %1622 = vmatpush1.msra.mxu0 %v349
    %1623 = vmatprep.subr.mxu0 %v346
    %1624 = vmatpush1.msra.mxu0 %v345
    %1625 = vmatprep.subr.mxu0 %v342
    %1626 = vmatpush1.msra.mxu0 %v341
    %1627 = vmatprep.subr.mxu0 0.0
    %1628 = vmatpush2.msra.mxu0 0.0
    %1629 = vmatprep.subr.mxu0 0.0
    %1630 = vmatpush2.msra.mxu0 0.0
    %1631 = vmatprep.subr.mxu0 0.0
    %1632 = vmatpush2.msra.mxu0 0.0
    %1633 = vmatprep.subr.mxu0 0.0
    %1634 = vmatpush2.msra.mxu0 0.0
    %1635 = vmatprep.subr.mxu0 0.0
    %1636 = vmatpush2.msra.mxu0 0.0
    %1637 = vmatprep.subr.mxu0 0.0
    %1638 = vmatpush2.msra.mxu0 0.0
    %1639 = vmatprep.subr.mxu0 0.0
    %1640 = vmatpush2.msra.mxu0 0.0
    %1641 = vmatprep.subr.mxu0 0.0
    %1642 = vmatpush2.msra.mxu0 0.0
    %1643 = vmatprep.subr.mxu0 0.0
    %1644 = vmatpush2.msra.mxu0 0.0
    %1645 = vmatprep.subr.mxu0 0.0
    %1646 = vmatpush2.msra.mxu0 0.0
    %1647 = vmatprep.subr.mxu0 0.0
    %1648 = vmatpush2.msra.mxu0 0.0
    %1649 = vmatprep.subr.mxu0 0.0
    %1650 = vmatpush2.msra.mxu0 0.0
    %1651 = vmatprep.subr.mxu0 0.0
    %1652 = vmatpush2.msra.mxu0 0.0
    %1653 = vmatprep.subr.mxu0 0.0
    %1654 = vmatpush2.msra.mxu0 0.0
    %1655 = vmatprep.subr.mxu0 0.0
    %1656 = vmatpush2.msra.mxu0 0.0
    %1657 = vmatprep.subr.mxu0 0.0
    %1658 = vmatpush2.msra.mxu0 0.0
    %1659 = vmatprep.mubr.f32.mxu0 0.0
    %1660 = vmatmul.mubr.f32.gmra.mxu0 %v1594
    %v1661 = vpop.f32.mrf.mxu0
    %v1662 = vadd.f32 0.0, %v1661
    %v1663 = vpop.f32.mrf.mxu0
    %v1664 = vadd.f32 0.0, %v1663
    %1665 = vdwg.mxu0
    %1666 = vmatprep.subr.mxu0 %v404
    %1667 = vmatpush1.msra.mxu0 %v403
    %1668 = vmatprep.subr.mxu0 %v400
    %1669 = vmatpush1.msra.mxu0 %v399
    %1670 = vmatprep.subr.mxu0 %v396
    %1671 = vmatpush1.msra.mxu0 %v395
    %1672 = vmatprep.subr.mxu0 %v392
    %1673 = vmatpush1.msra.mxu0 %v391
    %1674 = vmatprep.subr.mxu0 %v388
    %1675 = vmatpush1.msra.mxu0 %v387
    %1676 = vmatprep.subr.mxu0 %v384
    %1677 = vmatpush1.msra.mxu0 %v383
    %1678 = vmatprep.subr.mxu0 %v380
    %1679 = vmatpush1.msra.mxu0 %v379
    %1680 = vmatprep.subr.mxu0 %v376
    %1681 = vmatpush1.msra.mxu0 %v375
    %1682 = vmatprep.subr.mxu0 %v372
    %1683 = vmatpush1.msra.mxu0 %v371
    %1684 = vmatprep.subr.mxu0 %v368
    %1685 = vmatpush1.msra.mxu0 %v367
    %1686 = vmatprep.subr.mxu0 %v364
    %1687 = vmatpush1.msra.mxu0 %v363
    %1688 = vmatprep.subr.mxu0 %v360
    %1689 = vmatpush1.msra.mxu0 %v359
    %1690 = vmatprep.subr.mxu0 %v356
    %1691 = vmatpush1.msra.mxu0 %v355
    %1692 = vmatprep.subr.mxu0 %v352
    %1693 = vmatpush1.msra.mxu0 %v351
    %1694 = vmatprep.subr.mxu0 %v348
    %1695 = vmatpush1.msra.mxu0 %v347
    %1696 = vmatprep.subr.mxu0 %v344
    %1697 = vmatpush1.msra.mxu0 %v343
    %1698 = vmatprep.subr.mxu0 0.0
    %1699 = vmatpush2.msra.mxu0 0.0
    %1700 = vmatprep.subr.mxu0 0.0
    %1701 = vmatpush2.msra.mxu0 0.0
    %1702 = vmatprep.subr.mxu0 0.0
    %1703 = vmatpush2.msra.mxu0 0.0
    %1704 = vmatprep.subr.mxu0 0.0
    %1705 = vmatpush2.msra.mxu0 0.0
    %1706 = vmatprep.subr.mxu0 0.0
    %1707 = vmatpush2.msra.mxu0 0.0
    %1708 = vmatprep.subr.mxu0 0.0
    %1709 = vmatpush2.msra.mxu0 0.0
    %1710 = vmatprep.subr.mxu0 0.0
    %1711 = vmatpush2.msra.mxu0 0.0
    %1712 = vmatprep.subr.mxu0 0.0
    %1713 = vmatpush2.msra.mxu0 0.0
    %1714 = vmatprep.subr.mxu0 0.0
    %1715 = vmatpush2.msra.mxu0 0.0
    %1716 = vmatprep.subr.mxu0 0.0
    %1717 = vmatpush2.msra.mxu0 0.0
    %1718 = vmatprep.subr.mxu0 0.0
    %1719 = vmatpush2.msra.mxu0 0.0
    %1720 = vmatprep.subr.mxu0 0.0
    %1721 = vmatpush2.msra.mxu0 0.0
    %1722 = vmatprep.subr.mxu0 0.0
    %1723 = vmatpush2.msra.mxu0 0.0
    %1724 = vmatprep.subr.mxu0 0.0
    %1725 = vmatpush2.msra.mxu0 0.0
    %1726 = vmatprep.subr.mxu0 0.0
    %1727 = vmatpush2.msra.mxu0 0.0
    %1728 = vmatprep.subr.mxu0 0.0
    %1729 = vmatpush2.msra.mxu0 0.0
    %1730 = vmatprep.mubr.f32.mxu0 0.0
    %1731 = vmatmul.mubr.f32.gmra.mxu0 %v1594
    %v1732 = vpop.f32.mrf.mxu0
    %v1733 = vadd.f32 0.0, %v1732
    %v1734 = vpop.f32.mrf.mxu0
    %v1735 = vadd.f32 0.0, %v1734
    %1736 = vdwg.mxu0
    %v1737 = vadd.f32 %v224, %v1662
    %v1738 = vadd.f32 %v226, %v1664
    %v1739 = vadd.f32 %v337, %v1733
    %v1740 = vadd.f32 %v339, %v1735
    %v1741 = vxor.u32 %v1737, 2147483648
    %v1742 = vmul.f32 %v1741, 1.442695
    %v1743 = vpow.pop %v1742
    %v1744 = vadd.f32 %v1743, 1.0
    %v1745 = vrcp.pop %v1744
    %v1746 = vmul.f32 1.0, %v1745
    %v1747 = vxor.u32 %v1738, 2147483648
    %v1748 = vmul.f32 %v1747, 1.442695
    %v1749 = vpow.pop %v1748
    %v1750 = vadd.f32 %v1749, 1.0
    %v1751 = vrcp.pop %v1750
    %v1752 = vmul.f32 1.0, %v1751
    %v1753 = vtanh.pop %v1739
    %v1754 = vxor.u32 %v1740, 2147483648
    %v1755 = vmul.f32 %v1754, 1.442695
    %v1756 = vpow.pop %v1755
    %v1757 = vadd.f32 %v1756, 1.0
    %v1758 = vrcp.pop %v1757
    %v1759 = vmul.f32 1.0, %v1758
    %v1760 = vmul.f32 %v1752, %v1592
    %v1761 = vmul.f32 %v1746, %v1753
    %v1762 = vadd.f32 %v1760, %v1761
    %v1763 = vtanh.pop %v1762
    %v1764 = vmul.f32 %v1759, %v1763
    %v1765 = vld [vmem:[#allocation5] sm:$0xff]
    %v1766 = vld [vmem:[#allocation5 + $0x8] sm:$0xff]
    %v1767 = vld [vmem:[#allocation5 + $0x10] sm:$0xff]
    %v1768 = vld [vmem:[#allocation5 + $0x18] sm:$0xff]
    %v1769 = vld [vmem:[#allocation5 + $0x20] sm:$0xff]
    %v1770 = vld [vmem:[#allocation5 + $0x28] sm:$0xff]
    %v1771 = vld [vmem:[#allocation5 + $0x30] sm:$0xff]
    %v1772 = vld [vmem:[#allocation5 + $0x38] sm:$0xff]
    %v1773 = vld [vmem:[#allocation5 + $0x40] sm:$0xff]
    %v1774 = vld [vmem:[#allocation5 + $0x48] sm:$0xff]
    %v1775 = vld [vmem:[#allocation5 + $0x50] sm:$0xff]
    %v1776 = vld [vmem:[#allocation5 + $0x58] sm:$0xff]
    %v1777 = vld [vmem:[#allocation5 + $0x60] sm:$0xff]
    %v1778 = vld [vmem:[#allocation5 + $0x68] sm:$0xff]
    %v1779 = vld [vmem:[#allocation5 + $0x70] sm:$0xff]
    %v1780 = vld [vmem:[#allocation5 + $0x78] sm:$0xff]
    %v1781 = vld [vmem:[%s5] sm:$0x1]
    %v1783 = vlaneseq
    %v1784 = vshrl.u32 %v1783, 7
    %v1785 = vsub.s32 0, %v1784
    %v1786 = vrot.slane %v1781, %v1785
    %1788 = vmatprep.subr.mxu0 0.0
    %1789 = vmatpush1.msra.mxu0 %v1780
    %1790 = vmatprep.subr.mxu0 0.0
    %1791 = vmatpush1.msra.mxu0 %v1779
    %1792 = vmatprep.subr.mxu0 0.0
    %1793 = vmatpush1.msra.mxu0 %v1778
    %1794 = vmatprep.subr.mxu0 0.0
    %1795 = vmatpush1.msra.mxu0 %v1777
    %1796 = vmatprep.subr.mxu0 0.0
    %1797 = vmatpush1.msra.mxu0 %v1776
    %1798 = vmatprep.subr.mxu0 0.0
    %1799 = vmatpush1.msra.mxu0 %v1775
    %1800 = vmatprep.subr.mxu0 0.0
    %1801 = vmatpush1.msra.mxu0 %v1774
    %1802 = vmatprep.subr.mxu0 0.0
    %1803 = vmatpush1.msra.mxu0 %v1773
    %1804 = vmatprep.subr.mxu0 0.0
    %1805 = vmatpush1.msra.mxu0 %v1772
    %1806 = vmatprep.subr.mxu0 0.0
    %1807 = vmatpush1.msra.mxu0 %v1771
    %1808 = vmatprep.subr.mxu0 0.0
    %1809 = vmatpush1.msra.mxu0 %v1770
    %1810 = vmatprep.subr.mxu0 0.0
    %1811 = vmatpush1.msra.mxu0 %v1769
    %1812 = vmatprep.subr.mxu0 0.0
    %1813 = vmatpush1.msra.mxu0 %v1768
    %1814 = vmatprep.subr.mxu0 0.0
    %1815 = vmatpush1.msra.mxu0 %v1767
    %1816 = vmatprep.subr.mxu0 0.0
    %1817 = vmatpush1.msra.mxu0 %v1766
    %1818 = vmatprep.subr.mxu0 0.0
    %1819 = vmatpush1.msra.mxu0 %v1765
    %1820 = vmatprep.subr.mxu0 0.0
    %1821 = vmatpush2.msra.mxu0 0.0
    %1822 = vmatprep.subr.mxu0 0.0
    %1823 = vmatpush2.msra.mxu0 0.0
    %1824 = vmatprep.subr.mxu0 0.0
    %1825 = vmatpush2.msra.mxu0 0.0
    %1826 = vmatprep.subr.mxu0 0.0
    %1827 = vmatpush2.msra.mxu0 0.0
    %1828 = vmatprep.subr.mxu0 0.0
    %1829 = vmatpush2.msra.mxu0 0.0
    %1830 = vmatprep.subr.mxu0 0.0
    %1831 = vmatpush2.msra.mxu0 0.0
    %1832 = vmatprep.subr.mxu0 0.0
    %1833 = vmatpush2.msra.mxu0 0.0
    %1834 = vmatprep.subr.mxu0 0.0
    %1835 = vmatpush2.msra.mxu0 0.0
    %1836 = vmatprep.subr.mxu0 0.0
    %1837 = vmatpush2.msra.mxu0 0.0
    %1838 = vmatprep.subr.mxu0 0.0
    %1839 = vmatpush2.msra.mxu0 0.0
    %1840 = vmatprep.subr.mxu0 0.0
    %1841 = vmatpush2.msra.mxu0 0.0
    %1842 = vmatprep.subr.mxu0 0.0
    %1843 = vmatpush2.msra.mxu0 0.0
    %1844 = vmatprep.subr.mxu0 0.0
    %1845 = vmatpush2.msra.mxu0 0.0
    %1846 = vmatprep.subr.mxu0 0.0
    %1847 = vmatpush2.msra.mxu0 0.0
    %1848 = vmatprep.subr.mxu0 0.0
    %1849 = vmatpush2.msra.mxu0 0.0
    %1850 = vmatprep.subr.mxu0 0.0
    %1851 = vmatpush2.msra.mxu0 0.0
    %1852 = vmatprep.mubr.f32.mxu0 0.0
    %1853 = vmatmul.mubr.f32.gmra.mxu0 %v1764
    %v1854 = vpop.f32.mrf.mxu0
    %v1855 = vadd.f32 %v1786, %v1854
    %v1856 = vpop.f32.mrf.mxu0
    %1857 = vdwg.mxu0
    %1858 = vst [vmem:[#allocation7] sm:$0xff] %v1855
    // Predicated region
    $region34: #{tpu_custom_call.1} parent=1 // pred_check
      _
    $region35: #{tpu_custom_call.1} parent=1 // pred_check_branch
      %1860 = sbr.rel (0) target = $region37
    $region36: #{tpu_custom_call.1} parent=1 // pred_region
      %s1862 = ssub.s32 128, 128
      %1863 = vsyncadd [#allocation4], %s1862
      %s1865 = sshll.u32 [#allocation7], 4
      %s1866 = int_to_ptr.vmem [resolvable:$true] %s1865
      %1868 = dma.vmem_to_hbm [thread:$0]  %s1866, 128, %s6, [#allocation4]
    $region37: #{tpu_custom_call.1} parent=1 // pred_fallthru
      _
    // Predicated region
    $region38: #{tpu_custom_call.1} parent=1 // pred_check
      _
    $region39: #{tpu_custom_call.1} parent=1 // pred_check_branch
      %1870 = sbr.rel (0) target = $region41
    $region40: #{tpu_custom_call.1} parent=1 // pred_region
      %1871 = dma.done [#allocation4], 128
    $region41: #{tpu_custom_call.1} parent=1 // pred_fallthru
      _
    %1872 = vsyncpa [#allocation3], 1
    %1873 = vsyncpa [#allocation6], 1
    %1874 = vsyncpa [#allocation4], 1

</llo_original>
